<compile_context>
chip_gen: v7x
topology: tpu7x:2x2x1
jax: 0.10.0
libtpu: 0.0.40
codegen_flags: <defaults>
</compile_context>

<pallas_src>
import functools

import jax
import jax.numpy as jnp
from jax import lax
from jax.experimental import pallas as pl
from jax.experimental.pallas import tpu as pltpu

EPS = 1e-8  # matches nn.GroupNorm(1, C, eps=1e-08) used inside the TCN

# packed "hidden column" layout: one (H, _N_HCOL) tile per layer
_C1_B, _G1_G, _G1_B, _DW_B, _G2_G, _G2_B, _DW_W0, _DW_W1, _DW_W2 = range(9)
_N_HCOL = 9


# ---------------- in-kernel helpers (traced into the Pallas body) ----------------

def _groupnorm1(x, gamma, beta):
    """GroupNorm(num_groups=1): normalize over all (C, T) elements of one sample.

    Fused one-pass statistics (sum, sum of squares); biased variance like PyTorch.
    """
    n = x.size
    s1 = jnp.sum(x)
    s2 = jnp.sum(x * x)
    mu = s1 / n
    var = jnp.maximum(s2 / n - mu * mu, 0.0)
    return (x - mu) * lax.rsqrt(var + EPS) * gamma + beta


def _prelu(x, a):
    return jnp.where(x > 0, x, a * x)


# ------------------------------- Pallas kernel -----------------------------------

def tcn_kernel(dilations,              # static: per-stack dilations (len == layers/stack)
               x_ref,                  # (1, C_in, T)      input block (one sample)
               lngb_ref,               # (C_in, 2)         [LN gamma | LN beta]
               bnw_ref, bnb_ref,       # (BN, C_in), (BN, 1)
               c1w_ref,                # (layer, H, BN)    per-stack 1x1 conv weights
               hcol_ref,               # (layer, H, 9)     packed per-layer H-sized columns
               rsw_ref,                # (layer, 2*BN, H)  [res_w ; skip_w] stacked rows
               bcol_ref,               # (layer, BN, 2)    [res_b | skip_b]
               outw_ref, outb_ref,     # (OUT, BN), (OUT, 1)
               alpha_ref,              # SMEM (2*L+1,)     PReLU alphas (+ output alpha)
               o_ref,                  # (1, OUT, T)
               out_acc, skip_acc):     # VMEM scratch, (BN, T) each
    s = pl.program_id(1)
    n_stack = pl.num_programs(1)
    n_layer = len(dilations)
    H = hcol_ref.shape[1]
    T = x_ref.shape[-1]
    BN = out_acc.shape[0]

    # ---- front end (self.LN GroupNorm + self.BN 1x1 conv), first stack only ----
    @pl.when(s == 0)
    def _init():
        x = x_ref[0]                                            # (C_in, T)
        xn = _groupnorm1(x, lngb_ref[:, 0:1], lngb_ref[:, 1:2])
        out_acc[...] = (jnp.dot(bnw_ref[...], xn, preferred_element_type=jnp.float32)
                        + bnb_ref[...])
        skip_acc[...] = jnp.zeros_like(skip_acc)

    # time iota / shift masks built once per grid step (shared by all layers below)
    t_idx = lax.broadcasted_iota(jnp.int32, (H, T), 1)

    out = out_acc[...]
    skip = skip_acc[...]

    # ---- one stack of DepthConv1d blocks (static unroll, static dilations) ----
    for i, d in enumerate(dilations):
        hc = hcol_ref[i]                                        # (H, 9)
        l_global = s * n_layer + i
        a1 = alpha_ref[2 * l_global]
        a2 = alpha_ref[2 * l_global + 1]

        # 1x1 conv -> PReLU -> GroupNorm
        h = (jnp.dot(c1w_ref[i], out, preferred_element_type=jnp.float32)
             + hc[:, _C1_B:_C1_B + 1])
        h = _prelu(h, a1)
        h = _groupnorm1(h, hc[:, _G1_G:_G1_G + 1], hc[:, _G1_B:_G1_B + 1])

        # depthwise dilated conv, kernel=3, padding=d ('same' length):
        #   y[c,t] = w0[c]*h[c,t-d] + w1[c]*h[c,t] + w2[c]*h[c,t+d]  (zeros outside)
        left = jnp.where(t_idx >= d, pltpu.roll(h, d, axis=1), 0.0)
        right = jnp.where(t_idx < T - d, pltpu.roll(h, T - d, axis=1), 0.0)
        h = (hc[:, _DW_W0:_DW_W0 + 1] * left
             + hc[:, _DW_W1:_DW_W1 + 1] * h
             + hc[:, _DW_W2:_DW_W2 + 1] * right
             + hc[:, _DW_B:_DW_B + 1])
        h = _prelu(h, a2)
        h = _groupnorm1(h, hc[:, _G2_G:_G2_G + 1], hc[:, _G2_B:_G2_B + 1])

        # fused residual / skip 1x1 convs: single (2*BN, H) @ (H, T) matmul
        rs = jnp.dot(rsw_ref[i], h, preferred_element_type=jnp.float32)
        bc = bcol_ref[i]                                        # (BN, 2)
        out = out + rs[:BN] + bc[:, 0:1]
        skip = skip + rs[BN:] + bc[:, 1:2]

    out_acc[...] = out
    skip_acc[...] = skip

    # ---- output head (PReLU + 1x1 conv on the skip sum), last stack only ----
    @pl.when(s == n_stack - 1)
    def _finalize():
        out_a = alpha_ref[alpha_ref.shape[0] - 1]
        z = _prelu(skip, out_a)
        o_ref[0] = (jnp.dot(outw_ref[...], z, preferred_element_type=jnp.float32)
                    + outb_ref[...])


# ------------------------------ host-side wrapper ---------------------------------

def _vmem_limit_bytes():
    """Generation-aware scoped VMEM budget: <= 7/8 of physical, capped at 100 MiB."""
    try:
        cap = pltpu.get_tpu_info().vmem_capacity_bytes
    except Exception:
        cap = 64 * 1024 * 1024  # conservative fallback (v7x physical per-TC VMEM)
    return int(min(100 * 1024 * 1024, cap * 7 // 8))


def pack_params(params):
    """Pack the PyTorch-layout param dict into the kernel's stacked layout."""
    dw = params["dw_w"]                                                   # (L, H, 3)
    hcols = jnp.concatenate(
        [params["c1_b"], params["g1_g"], params["g1_b"],
         params["dw_b"], params["g2_g"], params["g2_b"],
         dw[:, :, 0:1], dw[:, :, 1:2], dw[:, :, 2:3]], axis=2)            # (L, H, 9)
    bcols = jnp.concatenate([params["res_b"], params["sk_b"]], axis=2)    # (L, BN, 2)
    rsw = jnp.concatenate([params["res_w"], params["sk_w"]], axis=1)      # (L, 2BN, H)
    lngb = jnp.concatenate([params["ln_g"], params["ln_b"]], axis=1)      # (C_in, 2)
    a12 = jnp.stack([params["pr1_a"][:, 0, 0], params["pr2_a"][:, 0, 0]], axis=1)
    alphas = jnp.concatenate([a12.reshape(-1), params["out_a"].reshape(-1)])
    return dict(lngb=lngb, bn_w=params["bn_w"], bn_b=params["bn_b"],
                c1_w=params["c1_w"], hcols=hcols, rsw=rsw, bcols=bcols,
                out_w=params["out_w"], out_b=params["out_b"],
                alphas=alphas.astype(jnp.float32))


def tcn_forward(x, params, layer, stack, dilated=True):
    B, C_in, T = x.shape
    BN = params["bn_w"].shape[0]
    H = params["c1_w"].shape[1]
    out_dim = params["out_w"].shape[0]
    L = layer * stack
    assert params["c1_w"].shape[0] == L

    dilations = tuple(2 ** i for i in range(layer)) if dilated else (1,) * layer

    # lane-dense layout requirements (biggest single perf lever): T on lanes,
    # channel dims on f32 sublane multiples.
    assert T % 128 == 0, "pad the time axis to a multiple of 128 before calling"
    for c in (C_in, BN, H, out_dim):
        assert c % 8 == 0, "channel dims must be multiples of 8 (f32 sublane tiling)"
    assert max(dilations) < T

    p = pack_params(params)
    weights = (p["lngb"], p["bn_w"], p["bn_b"], p["c1_w"], p["hcols"],
               p["rsw"], p["bcols"], p["out_w"], p["out_b"], p["alphas"])

    in_specs = [
        pl.BlockSpec((1, C_in, T), lambda b, s: (b, 0, 0)),            # x
        pl.BlockSpec((C_in, 2), lambda b, s: (0, 0)),                  # LN gamma/beta
        pl.BlockSpec((BN, C_in), lambda b, s: (0, 0)),                 # bn_w
        pl.BlockSpec((BN, 1), lambda b, s: (0, 0)),                    # bn_b
        pl.BlockSpec((layer, H, BN), lambda b, s: (s, 0, 0)),          # c1_w  (per stack)
        pl.BlockSpec((layer, H, _N_HCOL), lambda b, s: (s, 0, 0)),     # hcols (per stack)
        pl.BlockSpec((layer, 2 * BN, H), lambda b, s: (s, 0, 0)),      # res|skip weights
        pl.BlockSpec((layer, BN, 2), lambda b, s: (s, 0, 0)),          # res|skip biases
        pl.BlockSpec((out_dim, BN), lambda b, s: (0, 0)),              # out_w
        pl.BlockSpec((out_dim, 1), lambda b, s: (0, 0)),               # out_b
        pl.BlockSpec(memory_space=pltpu.MemorySpace.SMEM),             # PReLU alphas
    ]
    out_specs = pl.BlockSpec((1, out_dim, T), lambda b, s: (b, 0, 0))

    return pl.pallas_call(
        functools.partial(tcn_kernel, dilations),
        out_shape=jax.ShapeDtypeStruct((B, out_dim, T), jnp.float32),
        grid=(B, stack),
        in_specs=in_specs,
        out_specs=out_specs,
        scratch_shapes=[pltpu.VMEM((BN, T), jnp.float32),   # running output
                        pltpu.VMEM((BN, T), jnp.float32)],  # skip-connection sum
        compiler_params=pltpu.CompilerParams(
            dimension_semantics=("parallel", "arbitrary"),
            vmem_limit_bytes=_vmem_limit_bytes()),
    )(x, *weights)


# ------------------------- pure-JAX reference (ground truth) -----------------------

def tcn_reference(x, params, layer, stack, dilated=True):
    def gn(v, g, b):
        mu = jnp.mean(v)
        var = jnp.mean((v - mu) ** 2)
        return (v - mu) / jnp.sqrt(var + EPS) * g + b

    def prelu(v, a):
        return jnp.where(v > 0, v, a * v)

    def depthwise(v, w, b, d):
        _, T = v.shape
        vp = jnp.pad(v, ((0, 0), (d, d)))
        return (w[:, 0:1] * vp[:, 0:T] + w[:, 1:2] * vp[:, d:d + T]
                + w[:, 2:3] * vp[:, 2 * d:2 * d + T] + b)

    dil = [2 ** i for i in range(layer)] if dilated else [1] * layer
    outs = []
    for xb in x:
        out = params["bn_w"] @ gn(xb, params["ln_g"], params["ln_b"]) + params["bn_b"]
        skip = jnp.zeros_like(out)
        for l in range(layer * stack):
            d = dil[l % layer]
            h = params["c1_w"][l] @ out + params["c1_b"][l]
            h = gn(prelu(h, params["pr1_a"][l]), params["g1_g"][l], params["g1_b"][l])
            h = depthwise(h, params["dw_w"][l], params["dw_b"][l], d)
            h = gn(prelu(h, params["pr2_a"][l]), params["g2_g"][l], params["g2_b"][l])
            out = out + params["res_w"][l] @ h + params["res_b"][l]
            skip = skip + params["sk_w"][l] @ h + params["sk_b"][l]
        z = prelu(skip, params["out_a"])
        outs.append(params["out_w"] @ z + params["out_b"])
    return jnp.stack(outs)


# ------------------------------- parameter init ------------------------------------

def init_params(key, input_dim, output_dim, BN_dim, hidden_dim, layer, stack):
    L = layer * stack
    keys = jax.random.split(key, 16)
    f32 = jnp.float32
    n = lambda k, shape, s=0.1: (s * jax.random.normal(k, shape)).astype(f32)
    return {
        "ln_g": jnp.ones((input_dim, 1), f32),
        "ln_b": jnp.zeros((input_dim, 1), f32),
        "bn_w": n(keys[0], (BN_dim, input_dim)),
        "bn_b": n(keys[1], (BN_dim, 1), 0.01),
        "c1_w": n(keys[2], (L, hidden_dim, BN_dim)),
        "c1_b": n(keys[3], (L, hidden_dim, 1), 0.01),
        "pr1_a": jnp.full((L, 1, 1), 0.25, f32),
        "g1_g": jnp.ones((L, hidden_dim, 1), f32),
        "g1_b": jnp.zeros((L, hidden_dim, 1), f32),
        "dw_w": n(keys[4], (L, hidden_dim, 3)),
        "dw_b": n(keys[5], (L, hidden_dim, 1), 0.01),
        "pr2_a": jnp.full((L, 1, 1), 0.25, f32),
        "g2_g": jnp.ones((L, hidden_dim, 1), f32),
        "g2_b": jnp.zeros((L, hidden_dim, 1), f32),
        "res_w": n(keys[6], (L, BN_dim, hidden_dim)),
        "res_b": n(keys[7], (L, BN_dim, 1), 0.01),
        "sk_w": n(keys[8], (L, BN_dim, hidden_dim)),
        "sk_b": n(keys[9], (L, BN_dim, 1), 0.01),
        "out_a": jnp.full((1, 1), 0.25, f32),
        "out_w": n(keys[10], (output_dim, BN_dim)),
        "out_b": n(keys[11], (output_dim, 1), 0.01),
    }


if __name__ == "__main__":
    # small TCN config (lane-dense: T multiple of 128, channels multiples of 8)
    B, input_dim, output_dim = 2, 8, 8
    BN_dim, hidden_dim = 16, 32
    layer, stack = 2, 2
    T = 128

    key = jax.random.PRNGKey(0)
    kx, kp = jax.random.split(key)
    x = jax.random.normal(kx, (B, input_dim, T), dtype=jnp.float32)
    params = init_params(kp, input_dim, output_dim, BN_dim, hidden_dim, layer, stack)

    out = tcn_forward(x, params, layer, stack)
    out = jax.block_until_ready(out)
    assert out.shape == (B, output_dim, T)
    assert bool(jnp.all(jnp.isfinite(out)))

    # correctness check vs. pure-JAX reference (tolerance absorbs MXU f32 pass
    # decomposition vs. XLA matmul defaults; structural bugs give O(1) errors)
    ref = tcn_reference(x, params, layer, stack)
    assert bool(jnp.allclose(out, ref, atol=3e-2, rtol=3e-2))

    print("KERNEL_OK")
</pallas_src>

<mosaic_0001>
module attributes {stable_mosaic.version = 11 : i64} {
  func.func @tcn_kernel(%arg0: i32, %arg1: i32, %arg2: memref<1x8x128xf32, #tpu.memory_space<vmem>>, %arg3: memref<8x2xf32, #tpu.memory_space<vmem>>, %arg4: memref<16x8xf32, #tpu.memory_space<vmem>>, %arg5: memref<16x1xf32, #tpu.memory_space<vmem>>, %arg6: memref<2x32x16xf32, #tpu.memory_space<vmem>>, %arg7: memref<2x32x9xf32, #tpu.memory_space<vmem>>, %arg8: memref<2x32x32xf32, #tpu.memory_space<vmem>>, %arg9: memref<2x16x2xf32, #tpu.memory_space<vmem>>, %arg10: memref<8x16xf32, #tpu.memory_space<vmem>>, %arg11: memref<8x1xf32, #tpu.memory_space<vmem>>, %arg12: memref<9xf32, #tpu.memory_space<smem>>, %arg13: memref<1x8x128xf32, #tpu.memory_space<vmem>>, %arg14: memref<16x128xf32, #tpu.memory_space<vmem>>, %arg15: memref<16x128xf32, #tpu.memory_space<vmem>>) attributes {dimension_semantics = [#tpu.dimension_semantics<parallel>, #tpu.dimension_semantics<arbitrary>], iteration_bounds = array<i64: 2, 2>, scalar_prefetch = 0 : i64, scratch_operands = 2 : i64, tpu.core_type = #tpu.core_type<tc>, window_params = [{transform_indices = @transform_0, window_bounds = array<i64: 1, 8, 128>}, {pipeline_mode = #tpu.pipeline_mode<synchronous>, transform_indices = @transform_1, window_bounds = array<i64: 8, 2>}, {pipeline_mode = #tpu.pipeline_mode<synchronous>, transform_indices = @transform_2, window_bounds = array<i64: 16, 8>}, {pipeline_mode = #tpu.pipeline_mode<synchronous>, transform_indices = @transform_3, window_bounds = array<i64: 16, 1>}, {transform_indices = @transform_4, window_bounds = array<i64: 2, 32, 16>}, {transform_indices = @transform_5, window_bounds = array<i64: 2, 32, 9>}, {transform_indices = @transform_6, window_bounds = array<i64: 2, 32, 32>}, {transform_indices = @transform_7, window_bounds = array<i64: 2, 16, 2>}, {pipeline_mode = #tpu.pipeline_mode<synchronous>, transform_indices = @transform_8, window_bounds = array<i64: 8, 16>}, {pipeline_mode = #tpu.pipeline_mode<synchronous>, transform_indices = @transform_9, window_bounds = array<i64: 8, 1>}, {transform_indices = @transform_10, window_bounds = array<i64: 9>}, {transform_indices = @transform_11, window_bounds = array<i64: 1, 8, 128>}]} {
    %c0_i32 = arith.constant 0 : i32
    %0 = arith.cmpi eq, %arg1, %c0_i32 : i32
    %1 = arith.extui %0 : i1 to i32
    %c0_i32_0 = arith.constant 0 : i32
    %2 = arith.cmpi ne, %1, %c0_i32_0 : i32
    scf.if %2 {
      %c0_82 = arith.constant 0 : index
      %c0_83 = arith.constant 0 : index
      %c0_84 = arith.constant 0 : index
      %247 = vector.load %arg2[%c0_82, %c0_83, %c0_84] : memref<1x8x128xf32, #tpu.memory_space<vmem>>, vector<1x8x128xf32>
      %248 = vector.shape_cast %247 : vector<1x8x128xf32> to vector<8x128xf32>
      %c0_85 = arith.constant 0 : index
      %c0_86 = arith.constant 0 : index
      %249 = vector.load %arg3[%c0_85, %c0_86] : memref<8x2xf32, #tpu.memory_space<vmem>>, vector<8x1xf32>
      %c0_87 = arith.constant 0 : index
      %c1_88 = arith.constant 1 : index
      %250 = vector.load %arg3[%c0_87, %c1_88] : memref<8x2xf32, #tpu.memory_space<vmem>>, vector<8x1xf32>
      %251 = vector.shape_cast %248 : vector<8x128xf32> to vector<1x8x128xf32>
      %cst_89 = arith.constant dense<0.000000e+00> : vector<1xf32>
      %252 = vector.multi_reduction <add>, %251, %cst_89 [1, 2] : vector<1x8x128xf32> to vector<1xf32>
      %253 = vector.shape_cast %252 : vector<1xf32> to vector<1x1x1xf32>
      %254 = vector.extract %253[0, 0, 0] : f32 from vector<1x1x1xf32>
      %255 = arith.mulf %248, %248 : vector<8x128xf32>
      %256 = vector.shape_cast %255 : vector<8x128xf32> to vector<1x8x128xf32>
      %cst_90 = arith.constant dense<0.000000e+00> : vector<1xf32>
      %257 = vector.multi_reduction <add>, %256, %cst_90 [1, 2] : vector<1x8x128xf32> to vector<1xf32>
      %258 = vector.shape_cast %257 : vector<1xf32> to vector<1x1x1xf32>
      %259 = vector.extract %258[0, 0, 0] : f32 from vector<1x1x1xf32>
      %cst_91 = arith.constant 1.024000e+03 : f32
      %260 = arith.divf %254, %cst_91 : f32
      %cst_92 = arith.constant 1.024000e+03 : f32
      %261 = arith.divf %259, %cst_92 : f32
      %262 = arith.mulf %260, %260 : f32
      %263 = arith.subf %261, %262 : f32
      %cst_93 = arith.constant 0.000000e+00 : f32
      %264 = arith.maximumf %263, %cst_93 : f32
      %265 = vector.broadcast %260 : f32 to vector<8x128xf32>
      %266 = arith.subf %248, %265 : vector<8x128xf32>
      %cst_94 = arith.constant 9.99999993E-9 : f32
      %267 = arith.addf %264, %cst_94 : f32
      %268 = math.rsqrt %267 : f32
      %269 = vector.broadcast %268 : f32 to vector<8x128xf32>
      %270 = arith.mulf %266, %269 : vector<8x128xf32>
      %271 = vector.broadcast %249 : vector<8x1xf32> to vector<8x128xf32>
      %272 = arith.mulf %270, %271 : vector<8x128xf32>
      %273 = vector.broadcast %250 : vector<8x1xf32> to vector<8x128xf32>
      %274 = arith.addf %272, %273 : vector<8x128xf32>
      %c0_95 = arith.constant 0 : index
      %c0_96 = arith.constant 0 : index
      %275 = vector.load %arg4[%c0_95, %c0_96] : memref<16x8xf32, #tpu.memory_space<vmem>>, vector<16x8xf32>
      %cst_97 = arith.constant dense<0.000000e+00> : vector<16x128xf32>
      %276 = tpu.matmul %275, %274, %cst_97 {dimension_numbers = #tpu.dot_dimension_numbers<[1], [0], [0], [1], [0, 0, 1, 1], [], []>} : vector<16x8xf32>, vector<8x128xf32>, vector<16x128xf32> -> vector<16x128xf32>
      %c0_98 = arith.constant 0 : index
      %c0_99 = arith.constant 0 : index
      %277 = vector.load %arg5[%c0_98, %c0_99] : memref<16x1xf32, #tpu.memory_space<vmem>>, vector<16x1xf32>
      %278 = vector.broadcast %277 : vector<16x1xf32> to vector<16x128xf32>
      %279 = arith.addf %276, %278 : vector<16x128xf32>
      %c0_100 = arith.constant 0 : index
      %c0_101 = arith.constant 0 : index
      %280 = vector.load %arg14[%c0_100, %c0_101] : memref<16x128xf32, #tpu.memory_space<vmem>>, vector<16x128xf32>
      tpu.vector_store %arg14[%c0_100, %c0_101], %279 {strides = array<i32>} : memref<16x128xf32, #tpu.memory_space<vmem>>, vector<16x128xf32>,
      %cst_102 = arith.constant 0.000000e+00 : f32
      %281 = vector.broadcast %cst_102 : f32 to vector<16x128xf32>
      %c0_103 = arith.constant 0 : index
      %c0_104 = arith.constant 0 : index
      %282 = vector.load %arg15[%c0_103, %c0_104] : memref<16x128xf32, #tpu.memory_space<vmem>>, vector<16x128xf32>
      tpu.vector_store %arg15[%c0_103, %c0_104], %281 {strides = array<i32>} : memref<16x128xf32, #tpu.memory_space<vmem>>, vector<16x128xf32>,
    } else {
    }
    %3 = tpu.iota {dimensions = array<i32: 1>} : vector<32x128xi32>
    %c0 = arith.constant 0 : index
    %c0_1 = arith.constant 0 : index
    %4 = vector.load %arg14[%c0, %c0_1] : memref<16x128xf32, #tpu.memory_space<vmem>>, vector<16x128xf32>
    %c0_2 = arith.constant 0 : index
    %c0_3 = arith.constant 0 : index
    %5 = vector.load %arg15[%c0_2, %c0_3] : memref<16x128xf32, #tpu.memory_space<vmem>>, vector<16x128xf32>
    %c0_4 = arith.constant 0 : index
    %c0_5 = arith.constant 0 : index
    %c0_6 = arith.constant 0 : index
    %6 = vector.load %arg7[%c0_4, %c0_5, %c0_6] : memref<2x32x9xf32, #tpu.memory_space<vmem>>, vector<1x32x9xf32>
    %7 = vector.shape_cast %6 : vector<1x32x9xf32> to vector<32x9xf32>
    %c2_i32 = arith.constant 2 : i32
    %8 = arith.muli %arg1, %c2_i32 : i32
    %c0_i32_7 = arith.constant 0 : i32
    %9 = arith.addi %8, %c0_i32_7 : i32
    %c2_i32_8 = arith.constant 2 : i32
    %10 = arith.muli %c2_i32_8, %9 : i32
    %11 = arith.index_cast %10 : i32 to index
    %12 = memref.load %arg12[%11] : memref<9xf32, #tpu.memory_space<smem>>
    %c2_i32_9 = arith.constant 2 : i32
    %13 = arith.muli %c2_i32_9, %9 : i32
    %c1_i32 = arith.constant 1 : i32
    %14 = arith.addi %13, %c1_i32 : i32
    %15 = arith.index_cast %14 : i32 to index
    %16 = memref.load %arg12[%15] : memref<9xf32, #tpu.memory_space<smem>>
    %c0_10 = arith.constant 0 : index
    %c0_11 = arith.constant 0 : index
    %c0_12 = arith.constant 0 : index
    %17 = vector.load %arg6[%c0_10, %c0_11, %c0_12] : memref<2x32x16xf32, #tpu.memory_space<vmem>>, vector<1x32x16xf32>
    %18 = vector.shape_cast %17 : vector<1x32x16xf32> to vector<32x16xf32>
    %cst = arith.constant dense<0.000000e+00> : vector<32x128xf32>
    %19 = tpu.matmul %18, %4, %cst {dimension_numbers = #tpu.dot_dimension_numbers<[1], [0], [0], [1], [0, 0, 1, 1], [], []>} : vector<32x16xf32>, vector<16x128xf32>, vector<32x128xf32> -> vector<32x128xf32>
    %20 = vector.extract_strided_slice %7 {offsets = [0, 0], sizes = [32, 1], strides = [1, 1]} : vector<32x9xf32> to vector<32x1xf32>
    %21 = vector.broadcast %20 : vector<32x1xf32> to vector<32x128xf32>
    %22 = arith.addf %19, %21 : vector<32x128xf32>
    %cst_13 = arith.constant 0.000000e+00 : f32
    %23 = vector.broadcast %cst_13 : f32 to vector<32x128xf32>
    %24 = arith.cmpf ogt, %22, %23 : vector<32x128xf32>
    %25 = vector.broadcast %12 : f32 to vector<32x128xf32>
    %26 = arith.mulf %25, %22 : vector<32x128xf32>
    %27 = arith.select %24, %22, %26 : vector<32x128xi1>, vector<32x128xf32>
    %28 = vector.extract_strided_slice %7 {offsets = [0, 1], sizes = [32, 1], strides = [1, 1]} : vector<32x9xf32> to vector<32x1xf32>
    %29 = vector.extract_strided_slice %7 {offsets = [0, 2], sizes = [32, 1], strides = [1, 1]} : vector<32x9xf32> to vector<32x1xf32>
    %30 = vector.shape_cast %27 : vector<32x128xf32> to vector<1x32x128xf32>
    %cst_14 = arith.constant dense<0.000000e+00> : vector<1xf32>
    %31 = vector.multi_reduction <add>, %30, %cst_14 [1, 2] : vector<1x32x128xf32> to vector<1xf32>
    %32 = vector.shape_cast %31 : vector<1xf32> to vector<1x1x1xf32>
    %33 = vector.extract %32[0, 0, 0] : f32 from vector<1x1x1xf32>
    %34 = arith.mulf %27, %27 : vector<32x128xf32>
    %35 = vector.shape_cast %34 : vector<32x128xf32> to vector<1x32x128xf32>
    %cst_15 = arith.constant dense<0.000000e+00> : vector<1xf32>
    %36 = vector.multi_reduction <add>, %35, %cst_15 [1, 2] : vector<1x32x128xf32> to vector<1xf32>
    %37 = vector.shape_cast %36 : vector<1xf32> to vector<1x1x1xf32>
    %38 = vector.extract %37[0, 0, 0] : f32 from vector<1x1x1xf32>
    %cst_16 = arith.constant 4.096000e+03 : f32
    %39 = arith.divf %33, %cst_16 : f32
    %cst_17 = arith.constant 4.096000e+03 : f32
    %40 = arith.divf %38, %cst_17 : f32
    %41 = arith.mulf %39, %39 : f32
    %42 = arith.subf %40, %41 : f32
    %cst_18 = arith.constant 0.000000e+00 : f32
    %43 = arith.maximumf %42, %cst_18 : f32
    %44 = vector.broadcast %39 : f32 to vector<32x128xf32>
    %45 = arith.subf %27, %44 : vector<32x128xf32>
    %cst_19 = arith.constant 9.99999993E-9 : f32
    %46 = arith.addf %43, %cst_19 : f32
    %47 = math.rsqrt %46 : f32
    %48 = vector.broadcast %47 : f32 to vector<32x128xf32>
    %49 = arith.mulf %45, %48 : vector<32x128xf32>
    %50 = vector.broadcast %28 : vector<32x1xf32> to vector<32x128xf32>
    %51 = arith.mulf %49, %50 : vector<32x128xf32>
    %52 = vector.broadcast %29 : vector<32x1xf32> to vector<32x128xf32>
    %53 = arith.addf %51, %52 : vector<32x128xf32>
    %c1_i32_20 = arith.constant 1 : i32
    %54 = vector.broadcast %c1_i32_20 : i32 to vector<32x128xi32>
    %55 = arith.cmpi sge, %3, %54 : vector<32x128xi32>
    %c1_i32_21 = arith.constant 1 : i32
    %56 = tpu.dynamic_rotate %53 by %c1_i32_21 dim 1 : vector<32x128xf32>, i32 -> vector<32x128xf32>
    %cst_22 = arith.constant 0.000000e+00 : f32
    %57 = vector.broadcast %cst_22 : f32 to vector<32x128xf32>
    %58 = arith.select %55, %56, %57 : vector<32x128xi1>, vector<32x128xf32>
    %c127_i32 = arith.constant 127 : i32
    %59 = vector.broadcast %c127_i32 : i32 to vector<32x128xi32>
    %60 = arith.cmpi slt, %3, %59 : vector<32x128xi32>
    %c127_i32_23 = arith.constant 127 : i32
    %61 = tpu.dynamic_rotate %53 by %c127_i32_23 dim 1 : vector<32x128xf32>, i32 -> vector<32x128xf32>
    %cst_24 = arith.constant 0.000000e+00 : f32
    %62 = vector.broadcast %cst_24 : f32 to vector<32x128xf32>
    %63 = arith.select %60, %61, %62 : vector<32x128xi1>, vector<32x128xf32>
    %64 = vector.extract_strided_slice %7 {offsets = [0, 6], sizes = [32, 1], strides = [1, 1]} : vector<32x9xf32> to vector<32x1xf32>
    %65 = vector.broadcast %64 : vector<32x1xf32> to vector<32x128xf32>
    %66 = arith.mulf %65, %58 : vector<32x128xf32>
    %67 = vector.extract_strided_slice %7 {offsets = [0, 7], sizes = [32, 1], strides = [1, 1]} : vector<32x9xf32> to vector<32x1xf32>
    %68 = vector.broadcast %67 : vector<32x1xf32> to vector<32x128xf32>
    %69 = arith.mulf %68, %53 : vector<32x128xf32>
    %70 = arith.addf %66, %69 : vector<32x128xf32>
    %71 = vector.extract_strided_slice %7 {offsets = [0, 8], sizes = [32, 1], strides = [1, 1]} : vector<32x9xf32> to vector<32x1xf32>
    %72 = vector.broadcast %71 : vector<32x1xf32> to vector<32x128xf32>
    %73 = arith.mulf %72, %63 : vector<32x128xf32>
    %74 = arith.addf %70, %73 : vector<32x128xf32>
    %75 = vector.extract_strided_slice %7 {offsets = [0, 3], sizes = [32, 1], strides = [1, 1]} : vector<32x9xf32> to vector<32x1xf32>
    %76 = vector.broadcast %75 : vector<32x1xf32> to vector<32x128xf32>
    %77 = arith.addf %74, %76 : vector<32x128xf32>
    %cst_25 = arith.constant 0.000000e+00 : f32
    %78 = vector.broadcast %cst_25 : f32 to vector<32x128xf32>
    %79 = arith.cmpf ogt, %77, %78 : vector<32x128xf32>
    %80 = vector.broadcast %16 : f32 to vector<32x128xf32>
    %81 = arith.mulf %80, %77 : vector<32x128xf32>
    %82 = arith.select %79, %77, %81 : vector<32x128xi1>, vector<32x128xf32>
    %83 = vector.extract_strided_slice %7 {offsets = [0, 4], sizes = [32, 1], strides = [1, 1]} : vector<32x9xf32> to vector<32x1xf32>
    %84 = vector.extract_strided_slice %7 {offsets = [0, 5], sizes = [32, 1], strides = [1, 1]} : vector<32x9xf32> to vector<32x1xf32>
    %85 = vector.shape_cast %82 : vector<32x128xf32> to vector<1x32x128xf32>
    %cst_26 = arith.constant dense<0.000000e+00> : vector<1xf32>
    %86 = vector.multi_reduction <add>, %85, %cst_26 [1, 2] : vector<1x32x128xf32> to vector<1xf32>
    %87 = vector.shape_cast %86 : vector<1xf32> to vector<1x1x1xf32>
    %88 = vector.extract %87[0, 0, 0] : f32 from vector<1x1x1xf32>
    %89 = arith.mulf %82, %82 : vector<32x128xf32>
    %90 = vector.shape_cast %89 : vector<32x128xf32> to vector<1x32x128xf32>
    %cst_27 = arith.constant dense<0.000000e+00> : vector<1xf32>
    %91 = vector.multi_reduction <add>, %90, %cst_27 [1, 2] : vector<1x32x128xf32> to vector<1xf32>
    %92 = vector.shape_cast %91 : vector<1xf32> to vector<1x1x1xf32>
    %93 = vector.extract %92[0, 0, 0] : f32 from vector<1x1x1xf32>
    %cst_28 = arith.constant 4.096000e+03 : f32
    %94 = arith.divf %88, %cst_28 : f32
    %cst_29 = arith.constant 4.096000e+03 : f32
    %95 = arith.divf %93, %cst_29 : f32
    %96 = arith.mulf %94, %94 : f32
    %97 = arith.subf %95, %96 : f32
    %cst_30 = arith.constant 0.000000e+00 : f32
    %98 = arith.maximumf %97, %cst_30 : f32
    %99 = vector.broadcast %94 : f32 to vector<32x128xf32>
    %100 = arith.subf %82, %99 : vector<32x128xf32>
    %cst_31 = arith.constant 9.99999993E-9 : f32
    %101 = arith.addf %98, %cst_31 : f32
    %102 = math.rsqrt %101 : f32
    %103 = vector.broadcast %102 : f32 to vector<32x128xf32>
    %104 = arith.mulf %100, %103 : vector<32x128xf32>
    %105 = vector.broadcast %83 : vector<32x1xf32> to vector<32x128xf32>
    %106 = arith.mulf %104, %105 : vector<32x128xf32>
    %107 = vector.broadcast %84 : vector<32x1xf32> to vector<32x128xf32>
    %108 = arith.addf %106, %107 : vector<32x128xf32>
    %c0_32 = arith.constant 0 : index
    %c0_33 = arith.constant 0 : index
    %c0_34 = arith.constant 0 : index
    %109 = vector.load %arg8[%c0_32, %c0_33, %c0_34] : memref<2x32x32xf32, #tpu.memory_space<vmem>>, vector<1x32x32xf32>
    %110 = vector.shape_cast %109 : vector<1x32x32xf32> to vector<32x32xf32>
    %cst_35 = arith.constant dense<0.000000e+00> : vector<32x128xf32>
    %111 = tpu.matmul %110, %108, %cst_35 {dimension_numbers = #tpu.dot_dimension_numbers<[1], [0], [0], [1], [0, 0, 1, 1], [], []>} : vector<32x32xf32>, vector<32x128xf32>, vector<32x128xf32> -> vector<32x128xf32>
    %c0_36 = arith.constant 0 : index
    %c0_37 = arith.constant 0 : index
    %c0_38 = arith.constant 0 : index
    %112 = vector.load %arg9[%c0_36, %c0_37, %c0_38] : memref<2x16x2xf32, #tpu.memory_space<vmem>>, vector<1x16x2xf32>
    %113 = vector.shape_cast %112 : vector<1x16x2xf32> to vector<16x2xf32>
    %114 = vector.extract_strided_slice %111 {offsets = [0, 0], sizes = [16, 128], strides = [1, 1]} : vector<32x128xf32> to vector<16x128xf32>
    %115 = arith.addf %4, %114 : vector<16x128xf32>
    %116 = vector.extract_strided_slice %113 {offsets = [0, 0], sizes = [16, 1], strides = [1, 1]} : vector<16x2xf32> to vector<16x1xf32>
    %117 = vector.broadcast %116 : vector<16x1xf32> to vector<16x128xf32>
    %118 = arith.addf %115, %117 : vector<16x128xf32>
    %119 = vector.extract_strided_slice %111 {offsets = [16, 0], sizes = [16, 128], strides = [1, 1]} : vector<32x128xf32> to vector<16x128xf32>
    %120 = arith.addf %5, %119 : vector<16x128xf32>
    %121 = vector.extract_strided_slice %113 {offsets = [0, 1], sizes = [16, 1], strides = [1, 1]} : vector<16x2xf32> to vector<16x1xf32>
    %122 = vector.broadcast %121 : vector<16x1xf32> to vector<16x128xf32>
    %123 = arith.addf %120, %122 : vector<16x128xf32>
    %c1 = arith.constant 1 : index
    %c0_39 = arith.constant 0 : index
    %c0_40 = arith.constant 0 : index
    %124 = vector.load %arg7[%c1, %c0_39, %c0_40] : memref<2x32x9xf32, #tpu.memory_space<vmem>>, vector<1x32x9xf32>
    %125 = vector.shape_cast %124 : vector<1x32x9xf32> to vector<32x9xf32>
    %c2_i32_41 = arith.constant 2 : i32
    %126 = arith.muli %arg1, %c2_i32_41 : i32
    %c1_i32_42 = arith.constant 1 : i32
    %127 = arith.addi %126, %c1_i32_42 : i32
    %c2_i32_43 = arith.constant 2 : i32
    %128 = arith.muli %c2_i32_43, %127 : i32
    %129 = arith.index_cast %128 : i32 to index
    %130 = memref.load %arg12[%129] : memref<9xf32, #tpu.memory_space<smem>>
    %c2_i32_44 = arith.constant 2 : i32
    %131 = arith.muli %c2_i32_44, %127 : i32
    %c1_i32_45 = arith.constant 1 : i32
    %132 = arith.addi %131, %c1_i32_45 : i32
    %133 = arith.index_cast %132 : i32 to index
    %134 = memref.load %arg12[%133] : memref<9xf32, #tpu.memory_space<smem>>
    %c1_46 = arith.constant 1 : index
    %c0_47 = arith.constant 0 : index
    %c0_48 = arith.constant 0 : index
    %135 = vector.load %arg6[%c1_46, %c0_47, %c0_48] : memref<2x32x16xf32, #tpu.memory_space<vmem>>, vector<1x32x16xf32>
    %136 = vector.shape_cast %135 : vector<1x32x16xf32> to vector<32x16xf32>
    %cst_49 = arith.constant dense<0.000000e+00> : vector<32x128xf32>
    %137 = tpu.matmul %136, %118, %cst_49 {dimension_numbers = #tpu.dot_dimension_numbers<[1], [0], [0], [1], [0, 0, 1, 1], [], []>} : vector<32x16xf32>, vector<16x128xf32>, vector<32x128xf32> -> vector<32x128xf32>
    %138 = vector.extract_strided_slice %125 {offsets = [0, 0], sizes = [32, 1], strides = [1, 1]} : vector<32x9xf32> to vector<32x1xf32>
    %139 = vector.broadcast %138 : vector<32x1xf32> to vector<32x128xf32>
    %140 = arith.addf %137, %139 : vector<32x128xf32>
    %cst_50 = arith.constant 0.000000e+00 : f32
    %141 = vector.broadcast %cst_50 : f32 to vector<32x128xf32>
    %142 = arith.cmpf ogt, %140, %141 : vector<32x128xf32>
    %143 = vector.broadcast %130 : f32 to vector<32x128xf32>
    %144 = arith.mulf %143, %140 : vector<32x128xf32>
    %145 = arith.select %142, %140, %144 : vector<32x128xi1>, vector<32x128xf32>
    %146 = vector.extract_strided_slice %125 {offsets = [0, 1], sizes = [32, 1], strides = [1, 1]} : vector<32x9xf32> to vector<32x1xf32>
    %147 = vector.extract_strided_slice %125 {offsets = [0, 2], sizes = [32, 1], strides = [1, 1]} : vector<32x9xf32> to vector<32x1xf32>
    %148 = vector.shape_cast %145 : vector<32x128xf32> to vector<1x32x128xf32>
    %cst_51 = arith.constant dense<0.000000e+00> : vector<1xf32>
    %149 = vector.multi_reduction <add>, %148, %cst_51 [1, 2] : vector<1x32x128xf32> to vector<1xf32>
    %150 = vector.shape_cast %149 : vector<1xf32> to vector<1x1x1xf32>
    %151 = vector.extract %150[0, 0, 0] : f32 from vector<1x1x1xf32>
    %152 = arith.mulf %145, %145 : vector<32x128xf32>
    %153 = vector.shape_cast %152 : vector<32x128xf32> to vector<1x32x128xf32>
    %cst_52 = arith.constant dense<0.000000e+00> : vector<1xf32>
    %154 = vector.multi_reduction <add>, %153, %cst_52 [1, 2] : vector<1x32x128xf32> to vector<1xf32>
    %155 = vector.shape_cast %154 : vector<1xf32> to vector<1x1x1xf32>
    %156 = vector.extract %155[0, 0, 0] : f32 from vector<1x1x1xf32>
    %cst_53 = arith.constant 4.096000e+03 : f32
    %157 = arith.divf %151, %cst_53 : f32
    %cst_54 = arith.constant 4.096000e+03 : f32
    %158 = arith.divf %156, %cst_54 : f32
    %159 = arith.mulf %157, %157 : f32
    %160 = arith.subf %158, %159 : f32
    %cst_55 = arith.constant 0.000000e+00 : f32
    %161 = arith.maximumf %160, %cst_55 : f32
    %162 = vector.broadcast %157 : f32 to vector<32x128xf32>
    %163 = arith.subf %145, %162 : vector<32x128xf32>
    %cst_56 = arith.constant 9.99999993E-9 : f32
    %164 = arith.addf %161, %cst_56 : f32
    %165 = math.rsqrt %164 : f32
    %166 = vector.broadcast %165 : f32 to vector<32x128xf32>
    %167 = arith.mulf %163, %166 : vector<32x128xf32>
    %168 = vector.broadcast %146 : vector<32x1xf32> to vector<32x128xf32>
    %169 = arith.mulf %167, %168 : vector<32x128xf32>
    %170 = vector.broadcast %147 : vector<32x1xf32> to vector<32x128xf32>
    %171 = arith.addf %169, %170 : vector<32x128xf32>
    %c2_i32_57 = arith.constant 2 : i32
    %172 = vector.broadcast %c2_i32_57 : i32 to vector<32x128xi32>
    %173 = arith.cmpi sge, %3, %172 : vector<32x128xi32>
    %c2_i32_58 = arith.constant 2 : i32
    %174 = tpu.dynamic_rotate %171 by %c2_i32_58 dim 1 : vector<32x128xf32>, i32 -> vector<32x128xf32>
    %cst_59 = arith.constant 0.000000e+00 : f32
    %175 = vector.broadcast %cst_59 : f32 to vector<32x128xf32>
    %176 = arith.select %173, %174, %175 : vector<32x128xi1>, vector<32x128xf32>
    %c126_i32 = arith.constant 126 : i32
    %177 = vector.broadcast %c126_i32 : i32 to vector<32x128xi32>
    %178 = arith.cmpi slt, %3, %177 : vector<32x128xi32>
    %c126_i32_60 = arith.constant 126 : i32
    %179 = tpu.dynamic_rotate %171 by %c126_i32_60 dim 1 : vector<32x128xf32>, i32 -> vector<32x128xf32>
    %cst_61 = arith.constant 0.000000e+00 : f32
    %180 = vector.broadcast %cst_61 : f32 to vector<32x128xf32>
    %181 = arith.select %178, %179, %180 : vector<32x128xi1>, vector<32x128xf32>
    %182 = vector.extract_strided_slice %125 {offsets = [0, 6], sizes = [32, 1], strides = [1, 1]} : vector<32x9xf32> to vector<32x1xf32>
    %183 = vector.broadcast %182 : vector<32x1xf32> to vector<32x128xf32>
    %184 = arith.mulf %183, %176 : vector<32x128xf32>
    %185 = vector.extract_strided_slice %125 {offsets = [0, 7], sizes = [32, 1], strides = [1, 1]} : vector<32x9xf32> to vector<32x1xf32>
    %186 = vector.broadcast %185 : vector<32x1xf32> to vector<32x128xf32>
    %187 = arith.mulf %186, %171 : vector<32x128xf32>
    %188 = arith.addf %184, %187 : vector<32x128xf32>
    %189 = vector.extract_strided_slice %125 {offsets = [0, 8], sizes = [32, 1], strides = [1, 1]} : vector<32x9xf32> to vector<32x1xf32>
    %190 = vector.broadcast %189 : vector<32x1xf32> to vector<32x128xf32>
    %191 = arith.mulf %190, %181 : vector<32x128xf32>
    %192 = arith.addf %188, %191 : vector<32x128xf32>
    %193 = vector.extract_strided_slice %125 {offsets = [0, 3], sizes = [32, 1], strides = [1, 1]} : vector<32x9xf32> to vector<32x1xf32>
    %194 = vector.broadcast %193 : vector<32x1xf32> to vector<32x128xf32>
    %195 = arith.addf %192, %194 : vector<32x128xf32>
    %cst_62 = arith.constant 0.000000e+00 : f32
    %196 = vector.broadcast %cst_62 : f32 to vector<32x128xf32>
    %197 = arith.cmpf ogt, %195, %196 : vector<32x128xf32>
    %198 = vector.broadcast %134 : f32 to vector<32x128xf32>
    %199 = arith.mulf %198, %195 : vector<32x128xf32>
    %200 = arith.select %197, %195, %199 : vector<32x128xi1>, vector<32x128xf32>
    %201 = vector.extract_strided_slice %125 {offsets = [0, 4], sizes = [32, 1], strides = [1, 1]} : vector<32x9xf32> to vector<32x1xf32>
    %202 = vector.extract_strided_slice %125 {offsets = [0, 5], sizes = [32, 1], strides = [1, 1]} : vector<32x9xf32> to vector<32x1xf32>
    %203 = vector.shape_cast %200 : vector<32x128xf32> to vector<1x32x128xf32>
    %cst_63 = arith.constant dense<0.000000e+00> : vector<1xf32>
    %204 = vector.multi_reduction <add>, %203, %cst_63 [1, 2] : vector<1x32x128xf32> to vector<1xf32>
    %205 = vector.shape_cast %204 : vector<1xf32> to vector<1x1x1xf32>
    %206 = vector.extract %205[0, 0, 0] : f32 from vector<1x1x1xf32>
    %207 = arith.mulf %200, %200 : vector<32x128xf32>
    %208 = vector.shape_cast %207 : vector<32x128xf32> to vector<1x32x128xf32>
    %cst_64 = arith.constant dense<0.000000e+00> : vector<1xf32>
    %209 = vector.multi_reduction <add>, %208, %cst_64 [1, 2] : vector<1x32x128xf32> to vector<1xf32>
    %210 = vector.shape_cast %209 : vector<1xf32> to vector<1x1x1xf32>
    %211 = vector.extract %210[0, 0, 0] : f32 from vector<1x1x1xf32>
    %cst_65 = arith.constant 4.096000e+03 : f32
    %212 = arith.divf %206, %cst_65 : f32
    %cst_66 = arith.constant 4.096000e+03 : f32
    %213 = arith.divf %211, %cst_66 : f32
    %214 = arith.mulf %212, %212 : f32
    %215 = arith.subf %213, %214 : f32
    %cst_67 = arith.constant 0.000000e+00 : f32
    %216 = arith.maximumf %215, %cst_67 : f32
    %217 = vector.broadcast %212 : f32 to vector<32x128xf32>
    %218 = arith.subf %200, %217 : vector<32x128xf32>
    %cst_68 = arith.constant 9.99999993E-9 : f32
    %219 = arith.addf %216, %cst_68 : f32
    %220 = math.rsqrt %219 : f32
    %221 = vector.broadcast %220 : f32 to vector<32x128xf32>
    %222 = arith.mulf %218, %221 : vector<32x128xf32>
    %223 = vector.broadcast %201 : vector<32x1xf32> to vector<32x128xf32>
    %224 = arith.mulf %222, %223 : vector<32x128xf32>
    %225 = vector.broadcast %202 : vector<32x1xf32> to vector<32x128xf32>
    %226 = arith.addf %224, %225 : vector<32x128xf32>
    %c1_69 = arith.constant 1 : index
    %c0_70 = arith.constant 0 : index
    %c0_71 = arith.constant 0 : index
    %227 = vector.load %arg8[%c1_69, %c0_70, %c0_71] : memref<2x32x32xf32, #tpu.memory_space<vmem>>, vector<1x32x32xf32>
    %228 = vector.shape_cast %227 : vector<1x32x32xf32> to vector<32x32xf32>
    %cst_72 = arith.constant dense<0.000000e+00> : vector<32x128xf32>
    %229 = tpu.matmul %228, %226, %cst_72 {dimension_numbers = #tpu.dot_dimension_numbers<[1], [0], [0], [1], [0, 0, 1, 1], [], []>} : vector<32x32xf32>, vector<32x128xf32>, vector<32x128xf32> -> vector<32x128xf32>
    %c1_73 = arith.constant 1 : index
    %c0_74 = arith.constant 0 : index
    %c0_75 = arith.constant 0 : index
    %230 = vector.load %arg9[%c1_73, %c0_74, %c0_75] : memref<2x16x2xf32, #tpu.memory_space<vmem>>, vector<1x16x2xf32>
    %231 = vector.shape_cast %230 : vector<1x16x2xf32> to vector<16x2xf32>
    %232 = vector.extract_strided_slice %229 {offsets = [0, 0], sizes = [16, 128], strides = [1, 1]} : vector<32x128xf32> to vector<16x128xf32>
    %233 = arith.addf %118, %232 : vector<16x128xf32>
    %234 = vector.extract_strided_slice %231 {offsets = [0, 0], sizes = [16, 1], strides = [1, 1]} : vector<16x2xf32> to vector<16x1xf32>
    %235 = vector.broadcast %234 : vector<16x1xf32> to vector<16x128xf32>
    %236 = arith.addf %233, %235 : vector<16x128xf32>
    %237 = vector.extract_strided_slice %229 {offsets = [16, 0], sizes = [16, 128], strides = [1, 1]} : vector<32x128xf32> to vector<16x128xf32>
    %238 = arith.addf %123, %237 : vector<16x128xf32>
    %239 = vector.extract_strided_slice %231 {offsets = [0, 1], sizes = [16, 1], strides = [1, 1]} : vector<16x2xf32> to vector<16x1xf32>
    %240 = vector.broadcast %239 : vector<16x1xf32> to vector<16x128xf32>
    %241 = arith.addf %238, %240 : vector<16x128xf32>
    %c0_76 = arith.constant 0 : index
    %c0_77 = arith.constant 0 : index
    %242 = vector.load %arg14[%c0_76, %c0_77] : memref<16x128xf32, #tpu.memory_space<vmem>>, vector<16x128xf32>
    tpu.vector_store %arg14[%c0_76, %c0_77], %236 {strides = array<i32>} : memref<16x128xf32, #tpu.memory_space<vmem>>, vector<16x128xf32>,
    %c0_78 = arith.constant 0 : index
    %c0_79 = arith.constant 0 : index
    %243 = vector.load %arg15[%c0_78, %c0_79] : memref<16x128xf32, #tpu.memory_space<vmem>>, vector<16x128xf32>
    tpu.vector_store %arg15[%c0_78, %c0_79], %241 {strides = array<i32>} : memref<16x128xf32, #tpu.memory_space<vmem>>, vector<16x128xf32>,
    %c1_i32_80 = arith.constant 1 : i32
    %244 = arith.cmpi eq, %arg1, %c1_i32_80 : i32
    %245 = arith.extui %244 : i1 to i32
    %c0_i32_81 = arith.constant 0 : i32
    %246 = arith.cmpi ne, %245, %c0_i32_81 : i32
    scf.if %246 {
      %c8 = arith.constant 8 : index
      %247 = memref.load %arg12[%c8] : memref<9xf32, #tpu.memory_space<smem>>
      %cst_82 = arith.constant 0.000000e+00 : f32
      %248 = vector.broadcast %cst_82 : f32 to vector<16x128xf32>
      %249 = arith.cmpf ogt, %241, %248 : vector<16x128xf32>
      %250 = vector.broadcast %247 : f32 to vector<16x128xf32>
      %251 = arith.mulf %250, %241 : vector<16x128xf32>
      %252 = arith.select %249, %241, %251 : vector<16x128xi1>, vector<16x128xf32>
      %c0_83 = arith.constant 0 : index
      %c0_84 = arith.constant 0 : index
      %253 = vector.load %arg10[%c0_83, %c0_84] : memref<8x16xf32, #tpu.memory_space<vmem>>, vector<8x16xf32>
      %cst_85 = arith.constant dense<0.000000e+00> : vector<8x128xf32>
      %254 = tpu.matmul %253, %252, %cst_85 {dimension_numbers = #tpu.dot_dimension_numbers<[1], [0], [0], [1], [0, 0, 1, 1], [], []>} : vector<8x16xf32>, vector<16x128xf32>, vector<8x128xf32> -> vector<8x128xf32>
      %c0_86 = arith.constant 0 : index
      %c0_87 = arith.constant 0 : index
      %255 = vector.load %arg11[%c0_86, %c0_87] : memref<8x1xf32, #tpu.memory_space<vmem>>, vector<8x1xf32>
      %256 = vector.broadcast %255 : vector<8x1xf32> to vector<8x128xf32>
      %257 = arith.addf %254, %256 : vector<8x128xf32>
      %c0_88 = arith.constant 0 : index
      %c0_89 = arith.constant 0 : index
      %c0_90 = arith.constant 0 : index
      %258 = vector.load %arg13[%c0_88, %c0_89, %c0_90] : memref<1x8x128xf32, #tpu.memory_space<vmem>>, vector<1x8x128xf32>
      %259 = vector.shape_cast %258 : vector<1x8x128xf32> to vector<8x128xf32>
      %260 = vector.shape_cast %257 : vector<8x128xf32> to vector<1x8x128xf32>
      tpu.vector_store %arg13[%c0_88, %c0_89, %c0_90], %260 {strides = array<i32>} : memref<1x8x128xf32, #tpu.memory_space<vmem>>, vector<1x8x128xf32>,
    } else {
    }
    return
  }
  func.func @transform_0(%arg0: i32, %arg1: i32) -> (i32, i32, i32) {
    %c0_i32 = arith.constant 0 : i32
    %c0_i32_0 = arith.constant 0 : i32
    %c0_i32_1 = arith.constant 0 : i32
    return %arg0, %c0_i32, %c0_i32_0 : i32, i32, i32
  }
  func.func @transform_1(%arg0: i32, %arg1: i32) -> (i32, i32) {
    %c0_i32 = arith.constant 0 : i32
    %c0_i32_0 = arith.constant 0 : i32
    %c0_i32_1 = arith.constant 0 : i32
    return %c0_i32, %c0_i32_0 : i32, i32
  }
  func.func @transform_2(%arg0: i32, %arg1: i32) -> (i32, i32) {
    %c0_i32 = arith.constant 0 : i32
    %c0_i32_0 = arith.constant 0 : i32
    %c0_i32_1 = arith.constant 0 : i32
    return %c0_i32, %c0_i32_0 : i32, i32
  }
  func.func @transform_3(%arg0: i32, %arg1: i32) -> (i32, i32) {
    %c0_i32 = arith.constant 0 : i32
    %c0_i32_0 = arith.constant 0 : i32
    %c0_i32_1 = arith.constant 0 : i32
    return %c0_i32, %c0_i32_0 : i32, i32
  }
  func.func @transform_4(%arg0: i32, %arg1: i32) -> (i32, i32, i32) {
    %c0_i32 = arith.constant 0 : i32
    %c0_i32_0 = arith.constant 0 : i32
    %c0_i32_1 = arith.constant 0 : i32
    return %arg1, %c0_i32, %c0_i32_0 : i32, i32, i32
  }
  func.func @transform_5(%arg0: i32, %arg1: i32) -> (i32, i32, i32) {
    %c0_i32 = arith.constant 0 : i32
    %c0_i32_0 = arith.constant 0 : i32
    %c0_i32_1 = arith.constant 0 : i32
    return %arg1, %c0_i32, %c0_i32_0 : i32, i32, i32
  }
  func.func @transform_6(%arg0: i32, %arg1: i32) -> (i32, i32, i32) {
    %c0_i32 = arith.constant 0 : i32
    %c0_i32_0 = arith.constant 0 : i32
    %c0_i32_1 = arith.constant 0 : i32
    return %arg1, %c0_i32, %c0_i32_0 : i32, i32, i32
  }
  func.func @transform_7(%arg0: i32, %arg1: i32) -> (i32, i32, i32) {
    %c0_i32 = arith.constant 0 : i32
    %c0_i32_0 = arith.constant 0 : i32
    %c0_i32_1 = arith.constant 0 : i32
    return %arg1, %c0_i32, %c0_i32_0 : i32, i32, i32
  }
  func.func @transform_8(%arg0: i32, %arg1: i32) -> (i32, i32) {
    %c0_i32 = arith.constant 0 : i32
    %c0_i32_0 = arith.constant 0 : i32
    %c0_i32_1 = arith.constant 0 : i32
    return %c0_i32, %c0_i32_0 : i32, i32
  }
  func.func @transform_9(%arg0: i32, %arg1: i32) -> (i32, i32) {
    %c0_i32 = arith.constant 0 : i32
    %c0_i32_0 = arith.constant 0 : i32
    %c0_i32_1 = arith.constant 0 : i32
    return %c0_i32, %c0_i32_0 : i32, i32
  }
  func.func @transform_10(%arg0: i32, %arg1: i32) -> i32 {
    %c0_i32 = arith.constant 0 : i32
    %c0_i32_0 = arith.constant 0 : i32
    return %c0_i32 : i32
  }
  func.func @transform_11(%arg0: i32, %arg1: i32) -> (i32, i32, i32) {
    %c0_i32 = arith.constant 0 : i32
    %c0_i32_0 = arith.constant 0 : i32
    %c0_i32_1 = arith.constant 0 : i32
    return %arg0, %c0_i32, %c0_i32_0 : i32, i32, i32
  }
}

</mosaic_0001>

<llo_original>
// kernel: tpu_custom_call.1
$region0: #{tpu_custom_call.1}
  #allocation0 [shape = 'u32[]', space=smem, size = 0x4, offset = 0x4, fixed_abs, tag = 'smem constant byte address 0x4 - core index']
  #allocation1 [shape = 'u32[144,128]{1,0:T(1,128)}', space=vmem, size = 0x12000, scoped, tag = 'internal scratch']
  #allocation2 [shape = 'f32[16,128]{1,0:T(8,128)}', space=vmem, size = 0x2000, scoped, tag = 'scratch operand']
  #allocation3 [shape = 'f32[16,128]{1,0:T(8,128)}', space=vmem, size = 0x2000, scoped, tag = 'scratch operand']
  %s0 = inlined_call_operand.vmem [shape: f32[2,8,128], index: 0, kind: input, shape index: {}]
  %s1 = inlined_call_operand.vmem [shape: f32[8,2], index: 1, kind: input, shape index: {}]
  %s2 = inlined_call_operand.vmem [shape: f32[16,8], index: 2, kind: input, shape index: {}]
  %s3 = inlined_call_operand.vmem [shape: f32[16,1], index: 3, kind: input, shape index: {}]
  %s4 = inlined_call_operand.vmem [shape: f32[4,32,16], index: 4, kind: input, shape index: {}]
  %s5 = inlined_call_operand.vmem [shape: f32[4,32,9], index: 5, kind: input, shape index: {}]
  %s6 = inlined_call_operand.vmem [shape: f32[4,32,32], index: 6, kind: input, shape index: {}]
  %s7 = inlined_call_operand.vmem [shape: f32[4,16,2], index: 7, kind: input, shape index: {}]
  %s8 = inlined_call_operand.vmem [shape: f32[8,16], index: 8, kind: input, shape index: {}]
  %s9 = inlined_call_operand.vmem [shape: f32[8,1], index: 9, kind: input, shape index: {}]
  %s10 = inlined_call_operand.vmem [shape: f32[9], index: 10, kind: input, shape index: {}]
  %s11 = inlined_call_operand.hbm [shape: f32[2,8,128], index: 11, kind: output, shape index: {}]
  %s12 = sld [smem:[#allocation0]]
  $region89: #{tpu_custom_call.1} parent=0
    _
  %s14 = ssub.s32 1, %s12
  %s15 = scalar_select 0, %s14, %s12
  $region1: #{tpu_custom_call.1} parent=0
    #allocation4 [shape = 'u8[512]{0}', space=smem, size = 0x200, scoped, tag = 'input window, operand 10, single buffered']
    #allocation5 [shape = 's32[2]{0}', space=sflag, size = 0x8, scoped, tag = 'scoped memory for tpu_custom_call.1']
    #allocation6 [shape = 's32[2]{0}', space=sflag, size = 0x8, scoped, tag = 'scoped memory for tpu_custom_call.1']
    #allocation7 [shape = 'u8[8192]{0}', space=vmem, size = 0x2000, scoped, tag = 'output window, operand 0']
    %16 = vsyncpa [#allocation6], 0
    %17 = vsyncpa [#allocation5], 0
    %s18 = scalar_lea.sflag [#allocation5], 1
    %19 = vsyncpa %s18, 0
    loop: start=0, step=1, limit=6
    $region2: #{tpu_custom_call.1} parent=1 // loop_pre_header
      _
    $region3: #{tpu_custom_call.1} parent=1 // loop_header
      %s21 = sphi 0, %s25
      %p22 = scmp.ge.s32.totalorder %s21, 6
      %s28 = sphi 0, %s40
      %s29 = sphi 0, %s36
      %s30 = sphi 0, %s28
      %s31 = sphi 0, %s29
      %s32 = sphi 0, %s30
      %s33 = sphi 0, %s31
      %s43 = sphi 0, %s45
      %s46 = sphi 0, %s43
      %s47 = sphi 0, %s46
      %s63 = sphi 0, %s47
      %s67 = sphi 0, %s67
      %s69 = sphi 0, %s67
      %s70 = sphi 0, %s69
      %s84 = sphi 0, %s70
      %s88 = sphi 0, %s88
      %s90 = sphi 0, %s88
      %s91 = sphi 0, %s90
      %s105 = sphi 0, %s91
      %s109 = sphi 0, %s109
      %s111 = sphi 0, %s109
      %s112 = sphi 0, %s111
      %s126 = sphi 0, %s112
      %s132 = sphi 0, %s134
      %s135 = sphi 0, %s132
      %s136 = sphi 0, %s135
      %s152 = sphi 0, %s136
      %s158 = sphi 0, %s160
      %s161 = sphi 0, %s158
      %s162 = sphi 0, %s161
      %s178 = sphi 0, %s162
      %s184 = sphi 0, %s186
      %s187 = sphi 0, %s184
      %s188 = sphi 0, %s187
      %s204 = sphi 0, %s188
      %s210 = sphi 0, %s212
      %s213 = sphi 0, %s210
      %s214 = sphi 0, %s213
      %s230 = sphi 0, %s214
      %s234 = sphi 0, %s234
      %s236 = sphi 0, %s234
      %s237 = sphi 0, %s236
      %s251 = sphi 0, %s237
      %s255 = sphi 0, %s255
      %s257 = sphi 0, %s255
      %s258 = sphi 0, %s257
      %s272 = sphi 0, %s258
      %s276 = sphi 0, %s276
      %s278 = sphi 0, %s276
      %s279 = sphi 0, %s278
      %s293 = sphi 0, %s279
      %s299 = sphi 0, %s301
      %s302 = sphi 0, %s299
      %s303 = sphi 0, %s302
      %s319 = sphi 0, %s303
    $region4: #{tpu_custom_call.1} parent=1 // loop_header_branch
      %24 = sbr.rel (%p22) target = $region8
    $region5: #{tpu_custom_call.1} parent=1 // loop_body
      %s26 = ssub.s32 %s21, 1
      %s27 = ssub.s32 %s21, 2
      %s34 = sadd.s32 1, %s29
      %p35 = scmp.ge.s32.totalorder %s34, 2
      %s36 = scalar_select %p35, 0, %s34
      %s37 = sadd.s32 1, %s28
      %s38 = scalar_select %p35, %s37, %s28
      %p39 = scmp.ge.s32.totalorder %s38, 2
      %s40 = scalar_select %p39, 0, %s38
      %s41 = ssub.s32 %s28, %s40
      %p42 = scmp.eq.s32.totalorder %s41, 0
      %s44 = sadd.s32 %s43, 1
      %s45 = scalar_select %p42, %s43, %s44
      %p48 = pneg %p42
      %p49 = scmp.eq.s32.totalorder %s21, 3
      %p50 = por %p48, %p49
      %p51 = scmp.ne.s32.totalorder %s43, %s46
      %p52 = scmp.eq.s32.totalorder %s21, 0
      %p53 = por %p51, %p52
      %p54 = scmp.ne.s32.totalorder %s43, %s46
      %p55 = scmp.eq.s32.totalorder %s26, 3
      %p56 = por %p54, %p55
      %p57 = scmp.ne.s32.totalorder %s46, %s47
      %p58 = scmp.eq.s32.totalorder %s26, 0
      %p59 = por %p57, %p58
      %p60 = scmp.ne.s32.totalorder %s46, %s47
      %p61 = scmp.eq.s32.totalorder %s27, 3
      %p62 = por %p60, %p61
      %p64 = scmp.ne.s32.totalorder %s47, %s63
      %p65 = scmp.eq.s32.totalorder %s27, 0
      %p66 = por %p64, %p65
      %s68 = sadd.s32 %s67, 1
      %p71 = scmp.eq.s32.totalorder %s21, 3
      %p72 = scmp.ne.s32.totalorder %s67, %s69
      %p73 = scmp.eq.s32.totalorder %s21, 0
      %p74 = por %p72, %p73
      %p75 = scmp.ne.s32.totalorder %s67, %s69
      %p76 = scmp.eq.s32.totalorder %s26, 3
      %p77 = por %p75, %p76
      %p78 = scmp.ne.s32.totalorder %s69, %s70
      %p79 = scmp.eq.s32.totalorder %s26, 0
      %p80 = por %p78, %p79
      %p81 = scmp.ne.s32.totalorder %s69, %s70
      %p82 = scmp.eq.s32.totalorder %s27, 3
      %p83 = por %p81, %p82
      %p85 = scmp.ne.s32.totalorder %s70, %s84
      %p86 = scmp.eq.s32.totalorder %s27, 0
      %p87 = por %p85, %p86
      %s89 = sadd.s32 %s88, 1
      %p92 = scmp.eq.s32.totalorder %s21, 3
      %p93 = scmp.ne.s32.totalorder %s88, %s90
      %p94 = scmp.eq.s32.totalorder %s21, 0
      %p95 = por %p93, %p94
      %p96 = scmp.ne.s32.totalorder %s88, %s90
      %p97 = scmp.eq.s32.totalorder %s26, 3
      %p98 = por %p96, %p97
      %p99 = scmp.ne.s32.totalorder %s90, %s91
      %p100 = scmp.eq.s32.totalorder %s26, 0
      %p101 = por %p99, %p100
      %p102 = scmp.ne.s32.totalorder %s90, %s91
      %p103 = scmp.eq.s32.totalorder %s27, 3
      %p104 = por %p102, %p103
      %p106 = scmp.ne.s32.totalorder %s91, %s105
      %p107 = scmp.eq.s32.totalorder %s27, 0
      %p108 = por %p106, %p107
      %s110 = sadd.s32 %s109, 1
      %p113 = scmp.eq.s32.totalorder %s21, 3
      %p114 = scmp.ne.s32.totalorder %s109, %s111
      %p115 = scmp.eq.s32.totalorder %s21, 0
      %p116 = por %p114, %p115
      %p117 = scmp.ne.s32.totalorder %s109, %s111
      %p118 = scmp.eq.s32.totalorder %s26, 3
      %p119 = por %p117, %p118
      %p120 = scmp.ne.s32.totalorder %s111, %s112
      %p121 = scmp.eq.s32.totalorder %s26, 0
      %p122 = por %p120, %p121
      %p123 = scmp.ne.s32.totalorder %s111, %s112
      %p124 = scmp.eq.s32.totalorder %s27, 3
      %p125 = por %p123, %p124
      %p127 = scmp.ne.s32.totalorder %s112, %s126
      %p128 = scmp.eq.s32.totalorder %s27, 0
      %p129 = por %p127, %p128
      %s130 = ssub.s32 %s29, %s36
      %p131 = scmp.eq.s32.totalorder %s130, 0
      %s133 = sadd.s32 %s132, 1
      %s134 = scalar_select %p131, %s132, %s133
      %p137 = pneg %p131
      %p138 = scmp.eq.s32.totalorder %s21, 3
      %p139 = por %p137, %p138
      %p140 = scmp.ne.s32.totalorder %s132, %s135
      %p141 = scmp.eq.s32.totalorder %s21, 0
      %p142 = por %p140, %p141
      %p143 = scmp.ne.s32.totalorder %s132, %s135
      %p144 = scmp.eq.s32.totalorder %s26, 3
      %p145 = por %p143, %p144
      %p146 = scmp.ne.s32.totalorder %s135, %s136
      %p147 = scmp.eq.s32.totalorder %s26, 0
      %p148 = por %p146, %p147
      %p149 = scmp.ne.s32.totalorder %s135, %s136
      %p150 = scmp.eq.s32.totalorder %s27, 3
      %p151 = por %p149, %p150
      %p153 = scmp.ne.s32.totalorder %s136, %s152
      %p154 = scmp.eq.s32.totalorder %s27, 0
      %p155 = por %p153, %p154
      %s156 = ssub.s32 %s29, %s36
      %p157 = scmp.eq.s32.totalorder %s156, 0
      %s159 = sadd.s32 %s158, 1
      %s160 = scalar_select %p157, %s158, %s159
      %p163 = pneg %p157
      %p164 = scmp.eq.s32.totalorder %s21, 3
      %p165 = por %p163, %p164
      %p166 = scmp.ne.s32.totalorder %s158, %s161
      %p167 = scmp.eq.s32.totalorder %s21, 0
      %p168 = por %p166, %p167
      %p169 = scmp.ne.s32.totalorder %s158, %s161
      %p170 = scmp.eq.s32.totalorder %s26, 3
      %p171 = por %p169, %p170
      %p172 = scmp.ne.s32.totalorder %s161, %s162
      %p173 = scmp.eq.s32.totalorder %s26, 0
      %p174 = por %p172, %p173
      %p175 = scmp.ne.s32.totalorder %s161, %s162
      %p176 = scmp.eq.s32.totalorder %s27, 3
      %p177 = por %p175, %p176
      %p179 = scmp.ne.s32.totalorder %s162, %s178
      %p180 = scmp.eq.s32.totalorder %s27, 0
      %p181 = por %p179, %p180
      %s182 = ssub.s32 %s29, %s36
      %p183 = scmp.eq.s32.totalorder %s182, 0
      %s185 = sadd.s32 %s184, 1
      %s186 = scalar_select %p183, %s184, %s185
      %p189 = pneg %p183
      %p190 = scmp.eq.s32.totalorder %s21, 3
      %p191 = por %p189, %p190
      %p192 = scmp.ne.s32.totalorder %s184, %s187
      %p193 = scmp.eq.s32.totalorder %s21, 0
      %p194 = por %p192, %p193
      %p195 = scmp.ne.s32.totalorder %s184, %s187
      %p196 = scmp.eq.s32.totalorder %s26, 3
      %p197 = por %p195, %p196
      %p198 = scmp.ne.s32.totalorder %s187, %s188
      %p199 = scmp.eq.s32.totalorder %s26, 0
      %p200 = por %p198, %p199
      %p201 = scmp.ne.s32.totalorder %s187, %s188
      %p202 = scmp.eq.s32.totalorder %s27, 3
      %p203 = por %p201, %p202
      %p205 = scmp.ne.s32.totalorder %s188, %s204
      %p206 = scmp.eq.s32.totalorder %s27, 0
      %p207 = por %p205, %p206
      %s208 = ssub.s32 %s29, %s36
      %p209 = scmp.eq.s32.totalorder %s208, 0
      %s211 = sadd.s32 %s210, 1
      %s212 = scalar_select %p209, %s210, %s211
      %p215 = pneg %p209
      %p216 = scmp.eq.s32.totalorder %s21, 3
      %p217 = por %p215, %p216
      %p218 = scmp.ne.s32.totalorder %s210, %s213
      %p219 = scmp.eq.s32.totalorder %s21, 0
      %p220 = por %p218, %p219
      %p221 = scmp.ne.s32.totalorder %s210, %s213
      %p222 = scmp.eq.s32.totalorder %s26, 3
      %p223 = por %p221, %p222
      %p224 = scmp.ne.s32.totalorder %s213, %s214
      %p225 = scmp.eq.s32.totalorder %s26, 0
      %p226 = por %p224, %p225
      %p227 = scmp.ne.s32.totalorder %s213, %s214
      %p228 = scmp.eq.s32.totalorder %s27, 3
      %p229 = por %p227, %p228
      %p231 = scmp.ne.s32.totalorder %s214, %s230
      %p232 = scmp.eq.s32.totalorder %s27, 0
      %p233 = por %p231, %p232
      %s235 = sadd.s32 %s234, 1
      %p238 = scmp.eq.s32.totalorder %s21, 3
      %p239 = scmp.ne.s32.totalorder %s234, %s236
      %p240 = scmp.eq.s32.totalorder %s21, 0
      %p241 = por %p239, %p240
      %p242 = scmp.ne.s32.totalorder %s234, %s236
      %p243 = scmp.eq.s32.totalorder %s26, 3
      %p244 = por %p242, %p243
      %p245 = scmp.ne.s32.totalorder %s236, %s237
      %p246 = scmp.eq.s32.totalorder %s26, 0
      %p247 = por %p245, %p246
      %p248 = scmp.ne.s32.totalorder %s236, %s237
      %p249 = scmp.eq.s32.totalorder %s27, 3
      %p250 = por %p248, %p249
      %p252 = scmp.ne.s32.totalorder %s237, %s251
      %p253 = scmp.eq.s32.totalorder %s27, 0
      %p254 = por %p252, %p253
      %s256 = sadd.s32 %s255, 1
      %p259 = scmp.eq.s32.totalorder %s21, 3
      %p260 = scmp.ne.s32.totalorder %s255, %s257
      %p261 = scmp.eq.s32.totalorder %s21, 0
      %p262 = por %p260, %p261
      %p263 = scmp.ne.s32.totalorder %s255, %s257
      %p264 = scmp.eq.s32.totalorder %s26, 3
      %p265 = por %p263, %p264
      %p266 = scmp.ne.s32.totalorder %s257, %s258
      %p267 = scmp.eq.s32.totalorder %s26, 0
      %p268 = por %p266, %p267
      %p269 = scmp.ne.s32.totalorder %s257, %s258
      %p270 = scmp.eq.s32.totalorder %s27, 3
      %p271 = por %p269, %p270
      %p273 = scmp.ne.s32.totalorder %s258, %s272
      %p274 = scmp.eq.s32.totalorder %s27, 0
      %p275 = por %p273, %p274
      %s277 = sadd.s32 %s276, 1
      %p280 = scmp.eq.s32.totalorder %s21, 3
      %p281 = scmp.ne.s32.totalorder %s276, %s278
      %p282 = scmp.eq.s32.totalorder %s21, 0
      %p283 = por %p281, %p282
      %p284 = scmp.ne.s32.totalorder %s276, %s278
      %p285 = scmp.eq.s32.totalorder %s26, 3
      %p286 = por %p284, %p285
      %p287 = scmp.ne.s32.totalorder %s278, %s279
      %p288 = scmp.eq.s32.totalorder %s26, 0
      %p289 = por %p287, %p288
      %p290 = scmp.ne.s32.totalorder %s278, %s279
      %p291 = scmp.eq.s32.totalorder %s27, 3
      %p292 = por %p290, %p291
      %p294 = scmp.ne.s32.totalorder %s279, %s293
      %p295 = scmp.eq.s32.totalorder %s27, 0
      %p296 = por %p294, %p295
      %s297 = ssub.s32 %s28, %s40
      %p298 = scmp.eq.s32.totalorder %s297, 0
      %s300 = sadd.s32 %s299, 1
      %s301 = scalar_select %p298, %s299, %s300
      %p304 = pneg %p298
      %p305 = scmp.eq.s32.totalorder %s21, 3
      %p306 = por %p304, %p305
      %p307 = scmp.ne.s32.totalorder %s299, %s302
      %p308 = scmp.eq.s32.totalorder %s21, 0
      %p309 = por %p307, %p308
      %p310 = scmp.ne.s32.totalorder %s299, %s302
      %p311 = scmp.eq.s32.totalorder %s26, 3
      %p312 = por %p310, %p311
      %p313 = scmp.ne.s32.totalorder %s302, %s303
      %p314 = scmp.eq.s32.totalorder %s26, 0
      %p315 = por %p313, %p314
      %p316 = scmp.ne.s32.totalorder %s302, %s303
      %p317 = scmp.eq.s32.totalorder %s27, 3
      %p318 = por %p316, %p317
      %p320 = scmp.ne.s32.totalorder %s303, %s319
      %p321 = scmp.eq.s32.totalorder %s27, 0
      %p322 = por %p320, %p321
      %p323 = scmp.le.s32.totalorder 1, %s21
      %p324 = scmp.lt.s32.totalorder %s21, 5
      %p325 = pnand %p323, %p324
      %p326 = pneg %p325
      // Predicated region
      $region9: #{tpu_custom_call.1} parent=5 // pred_check
        _
      $region10: #{tpu_custom_call.1} parent=5 // pred_check_branch
        %328 = sbr.rel (%p325) target = $region12
      $region11: #{tpu_custom_call.1} parent=5 // pred_region
        %s329 = ssub.s32 %s21, 1
        // Predicated region
        $region13: #{tpu_custom_call.1} parent=11 // pred_check
          %p330 = pneg %p80
        $region14: #{tpu_custom_call.1} parent=11 // pred_check_branch
          %332 = sbr.rel (%p330) target = $region16
        $region15: #{tpu_custom_call.1} parent=11 // pred_region
          _
        $region16: #{tpu_custom_call.1} parent=11 // pred_fallthru
          _
        // Predicated region
        $region17: #{tpu_custom_call.1} parent=11 // pred_check
          %p333 = pneg %p101
        $region18: #{tpu_custom_call.1} parent=11 // pred_check_branch
          %335 = sbr.rel (%p333) target = $region20
        $region19: #{tpu_custom_call.1} parent=11 // pred_region
          _
        $region20: #{tpu_custom_call.1} parent=11 // pred_fallthru
          _
        // Predicated region
        $region21: #{tpu_custom_call.1} parent=11 // pred_check
          %p336 = pneg %p122
        $region22: #{tpu_custom_call.1} parent=11 // pred_check_branch
          %338 = sbr.rel (%p336) target = $region24
        $region23: #{tpu_custom_call.1} parent=11 // pred_region
          _
        $region24: #{tpu_custom_call.1} parent=11 // pred_fallthru
          _
        // Predicated region
        $region25: #{tpu_custom_call.1} parent=11 // pred_check
          %p339 = pneg %p247
        $region26: #{tpu_custom_call.1} parent=11 // pred_check_branch
          %341 = sbr.rel (%p339) target = $region28
        $region27: #{tpu_custom_call.1} parent=11 // pred_region
          _
        $region28: #{tpu_custom_call.1} parent=11 // pred_fallthru
          _
        // Predicated region
        $region29: #{tpu_custom_call.1} parent=11 // pred_check
          %p342 = pneg %p268
        $region30: #{tpu_custom_call.1} parent=11 // pred_check_branch
          %344 = sbr.rel (%p342) target = $region32
        $region31: #{tpu_custom_call.1} parent=11 // pred_region
          _
        $region32: #{tpu_custom_call.1} parent=11 // pred_fallthru
          _
        // Predicated region
        $region33: #{tpu_custom_call.1} parent=11 // pred_check
          %p345 = pneg %p289
        $region34: #{tpu_custom_call.1} parent=11 // pred_check_branch
          %347 = sbr.rel (%p345) target = $region36
        $region35: #{tpu_custom_call.1} parent=11 // pred_region
          %s349 = ssub.s32 16, 16
          %350 = vsyncadd [#allocation6], %s349
          %s352 = sshll.u32 %s10, 4
          %s353 = int_to_ptr.vmem [resolvable:$true] %s352
          %355 = dma.vmem_to_smem %s353, 16, [#allocation4], [#allocation6]
        $region36: #{tpu_custom_call.1} parent=11 // pred_fallthru
          _
      $region12: #{tpu_custom_call.1} parent=5 // pred_fallthru
        _
      %p356 = scmp.lt.s32.totalorder %s21, 4
      // Predicated region
      $region37: #{tpu_custom_call.1} parent=5 // pred_check
        %p357 = pneg %p356
      $region38: #{tpu_custom_call.1} parent=5 // pred_check_branch
        %359 = sbr.rel (%p357) target = $region40
      $region39: #{tpu_custom_call.1} parent=5 // pred_region
        // Predicated region
        $region41: #{tpu_custom_call.1} parent=39 // pred_check
          %p360 = pneg %p53
        $region42: #{tpu_custom_call.1} parent=39 // pred_check_branch
          %362 = sbr.rel (%p360) target = $region44
        $region43: #{tpu_custom_call.1} parent=39 // pred_region
          %p363 = scmp.lt.s32.totalorder %s28, 1
          %s364 = scalar_select %p363, %s28, 1
          %s365 = smul.addr %s364, 8
          %s366 = scalar_lea.vmem %s0, %s365
        $region44: #{tpu_custom_call.1} parent=39 // pred_fallthru
          _
        // Predicated region
        $region45: #{tpu_custom_call.1} parent=39 // pred_check
          %p367 = pneg %p142
        $region46: #{tpu_custom_call.1} parent=39 // pred_check_branch
          %369 = sbr.rel (%p367) target = $region48
        $region47: #{tpu_custom_call.1} parent=39 // pred_region
          %s370 = smul.u32 2, %s29
          %p371 = scmp.lt.s32.totalorder %s370, 3
          %s372 = scalar_select %p371, %s370, 3
          %s373 = smul.addr %s372, 4
          %s374 = smul.addr %s373, 8
          %s375 = scalar_lea.vmem %s4, %s374
          %s376 = smul.u32 2, %s29
        $region48: #{tpu_custom_call.1} parent=39 // pred_fallthru
          _
        // Predicated region
        $region49: #{tpu_custom_call.1} parent=39 // pred_check
          %p377 = pneg %p168
        $region50: #{tpu_custom_call.1} parent=39 // pred_check_branch
          %379 = sbr.rel (%p377) target = $region52
        $region51: #{tpu_custom_call.1} parent=39 // pred_region
          %s380 = smul.u32 2, %s29
          %p381 = scmp.lt.s32.totalorder %s380, 3
          %s382 = scalar_select %p381, %s380, 3
          %s383 = smul.addr %s382, 4
          %s384 = smul.addr %s383, 8
          %s385 = scalar_lea.vmem %s5, %s384
          %s386 = smul.u32 2, %s29
        $region52: #{tpu_custom_call.1} parent=39 // pred_fallthru
          _
        // Predicated region
        $region53: #{tpu_custom_call.1} parent=39 // pred_check
          %p387 = pneg %p194
        $region54: #{tpu_custom_call.1} parent=39 // pred_check_branch
          %389 = sbr.rel (%p387) target = $region56
        $region55: #{tpu_custom_call.1} parent=39 // pred_region
          %s390 = smul.u32 2, %s29
          %p391 = scmp.lt.s32.totalorder %s390, 3
          %s392 = scalar_select %p391, %s390, 3
          %s393 = smul.addr %s392, 4
          %s394 = smul.addr %s393, 8
          %s395 = scalar_lea.vmem %s6, %s394
          %s396 = smul.u32 2, %s29
        $region56: #{tpu_custom_call.1} parent=39 // pred_fallthru
          _
        // Predicated region
        $region57: #{tpu_custom_call.1} parent=39 // pred_check
          %p397 = pneg %p220
        $region58: #{tpu_custom_call.1} parent=39 // pred_check_branch
          %399 = sbr.rel (%p397) target = $region60
        $region59: #{tpu_custom_call.1} parent=39 // pred_region
          %s400 = smul.u32 2, %s29
          %p401 = scmp.lt.s32.totalorder %s400, 3
          %s402 = scalar_select %p401, %s400, 3
          %s403 = smul.addr %s402, 2
          %s404 = smul.addr %s403, 8
          %s405 = scalar_lea.vmem %s7, %s404
          %s406 = smul.u32 2, %s29
        $region60: #{tpu_custom_call.1} parent=39 // pred_fallthru
          _
      $region40: #{tpu_custom_call.1} parent=5 // pred_fallthru
        _
      %p407 = scmp.le.s32.totalorder 1, %s21
      %p408 = scmp.lt.s32.totalorder %s21, 5
      %p409 = pnand %p407, %p408
      %p410 = pneg %p409
      // Predicated region
      $region61: #{tpu_custom_call.1} parent=5 // pred_check
        _
      $region62: #{tpu_custom_call.1} parent=5 // pred_check_branch
        %412 = sbr.rel (%p409) target = $region64
      $region63: #{tpu_custom_call.1} parent=5 // pred_region
        %s413 = ssub.s32 %s21, 1
        // Predicated region
        $region65: #{tpu_custom_call.1} parent=63 // pred_check
          %p414 = pneg %p289
        $region66: #{tpu_custom_call.1} parent=63 // pred_check_branch
          %416 = sbr.rel (%p414) target = $region68
        $region67: #{tpu_custom_call.1} parent=63 // pred_region
          %417 = dma.done [#allocation6], 16
        $region68: #{tpu_custom_call.1} parent=63 // pred_fallthru
          _
        %418 = sfence
        %p419 = scmp.lt.s32.totalorder %s30, 1
        %s420 = scalar_select %p419, %s30, 1
        %s421 = smul.addr %s420, 8
        %s422 = scalar_lea.vmem %s0, %s421
        %p423 = pneg %p59
        %p424 = pneg %p56
        %p425 = pneg %p80
        %p426 = pneg %p77
        %p427 = pneg %p101
        %p428 = pneg %p98
        %p429 = pneg %p122
        %p430 = pneg %p119
        %s431 = smul.u32 2, %s31
        %p432 = scmp.lt.s32.totalorder %s431, 3
        %s433 = scalar_select %p432, %s431, 3
        %s434 = smul.addr %s433, 4
        %s435 = smul.addr %s434, 8
        %s436 = scalar_lea.vmem %s4, %s435
        %p437 = pneg %p148
        %p438 = pneg %p145
        %s439 = smul.u32 2, %s31
        %p440 = scmp.lt.s32.totalorder %s439, 3
        %s441 = scalar_select %p440, %s439, 3
        %s442 = smul.addr %s441, 4
        %s443 = smul.addr %s442, 8
        %s444 = scalar_lea.vmem %s5, %s443
        %p445 = pneg %p174
        %p446 = pneg %p171
        %s447 = smul.u32 2, %s31
        %p448 = scmp.lt.s32.totalorder %s447, 3
        %s449 = scalar_select %p448, %s447, 3
        %s450 = smul.addr %s449, 4
        %s451 = smul.addr %s450, 8
        %s452 = scalar_lea.vmem %s6, %s451
        %p453 = pneg %p200
        %p454 = pneg %p197
        %s455 = smul.u32 2, %s31
        %p456 = scmp.lt.s32.totalorder %s455, 3
        %s457 = scalar_select %p456, %s455, 3
        %s458 = smul.addr %s457, 2
        %s459 = smul.addr %s458, 8
        %s460 = scalar_lea.vmem %s7, %s459
        %p461 = pneg %p226
        %p462 = pneg %p223
        %p463 = pneg %p247
        %p464 = pneg %p244
        %p465 = pneg %p268
        %p466 = pneg %p265
        %p467 = pneg %p289
        %p468 = pneg %p286
        %p469 = pneg %p315
        %p470 = pneg %p312
        %s471 = sand.u32 %s302, 1
        %s472 = scalar_lea.sflag [#allocation5], %s471
        %s473 = sand.u32 %s302, 1
        %s474 = smul.addr %s473, 8
        %s475 = scalar_lea.vmem [#allocation7], %s474
        %p476 = scmp.lt.s32.totalorder %s30, 1
        %s477 = scalar_select %p476, %s30, 1
        %s478 = smul.addr %s477, 8
        %s479 = scalar_lea.vmem %s0, %s478
        %s480 = smul.u32 2, %s31
        %p481 = scmp.lt.s32.totalorder %s480, 3
        %s482 = scalar_select %p481, %s480, 3
        %s483 = smul.addr %s482, 4
        %s484 = smul.addr %s483, 8
        %s485 = scalar_lea.vmem %s4, %s484
        %s486 = smul.u32 2, %s31
        %s487 = smul.u32 2, %s31
        %p488 = scmp.lt.s32.totalorder %s487, 3
        %s489 = scalar_select %p488, %s487, 3
        %s490 = smul.addr %s489, 4
        %s491 = smul.addr %s490, 8
        %s492 = scalar_lea.vmem %s5, %s491
        %s493 = smul.u32 2, %s31
        %s494 = smul.u32 2, %s31
        %p495 = scmp.lt.s32.totalorder %s494, 3
        %s496 = scalar_select %p495, %s494, 3
        %s497 = smul.addr %s496, 4
        %s498 = smul.addr %s497, 8
        %s499 = scalar_lea.vmem %s6, %s498
        %s500 = smul.u32 2, %s31
        %s501 = smul.u32 2, %s31
        %p502 = scmp.lt.s32.totalorder %s501, 3
        %s503 = scalar_select %p502, %s501, 3
        %s504 = smul.addr %s503, 2
        %s505 = smul.addr %s504, 8
        %s506 = scalar_lea.vmem %s7, %s505
        %s507 = smul.u32 2, %s31
        %p508 = scmp.eq.s32.totalorder %s31, 0
        // Predicated region
        $region69: #{tpu_custom_call.1} parent=63 // pred_check
          %p509 = pneg %p508
        $region70: #{tpu_custom_call.1} parent=63 // pred_check_branch
          %511 = sbr.rel (%p509) target = $region72
        $region71: #{tpu_custom_call.1} parent=63 // pred_region
          %v512 = vld [vmem:[%s479] sm:$0xff]
          %v513 = vld [vmem:[%s1] sm:$0xff]
          %514 = vadd.xlane.f32.xlu0 %v512
          %v515 = vpop.xlane.xlu0 %514
          %v516 = vrot.slane %v515, 4
          %v517 = vadd.f32 %v515, %v516
          %v518 = vrot.slane %v517, 2
          %v519 = vadd.f32 %v517, %v518
          %v520 = vrot.slane %v519, 1
          %v521 = vadd.f32 %v519, %v520
          %s522 = vtos %v521
          %v523 = vmul.f32 %v512, %v512
          %524 = vadd.xlane.f32.xlu0 %v523
          %v525 = vpop.xlane.xlu0 %524
          %v526 = vrot.slane %v525, 4
          %v527 = vadd.f32 %v525, %v526
          %v528 = vrot.slane %v527, 2
          %v529 = vadd.f32 %v527, %v528
          %v530 = vrot.slane %v529, 1
          %v531 = vadd.f32 %v529, %v530
          %s532 = vtos %v531
          %v533 = vrcp.pop 1024.0
          %s534 = vtos %v533
          %s535 = smul.f32 %s522, %s534
          %v536 = vrcp.pop 1024.0
          %s537 = vtos %v536
          %s538 = smul.f32 %s532, %s537
          %s539 = smul.f32 %s535, %s535
          %s540 = ssub.f32 %s538, %s539
          %s541 = smax.f32 %s540, 0.0
          %v542 = vstv %s535
          %v543 = vsub.f32 %v512, %v542
          %s544 = sadd.f32 %s541, 1e-08
          %v545 = vstv %s544
          %v546 = vrsqrt.pop %v545
          %s547 = vtos %v546
          %v548 = vstv %s547
          %v549 = vmul.f32 %v543, %v548
          %551 = vset.pattern.permute.xlu0 0
          %552 = vperm.xlu0 %551, %v513
          %v553 = vpop.permute.xlu0 %552
          %v555 = vmul.f32 %v549, %v553
          %556 = vset.pattern.permute.xlu0 1
          %557 = vperm.xlu0 %556, %v513
          %v558 = vpop.permute.xlu0 %557
          %v560 = vadd.f32 %v555, %v558
          %v561 = vld [vmem:[%s2] sm:$0xff]
          %v562 = vld [vmem:[%s2 + $0x8] sm:$0xff]
          %v563 = vld [vmem:[%s3] sm:$0xff]
          %v564 = vld [vmem:[%s3 + $0x8] sm:$0xff]
          %566 = vset.pattern.permute.xlu0 0
          %567 = vperm.xlu0 %566, %v563
          %v568 = vpop.permute.xlu0 %567
          %571 = vset.pattern.permute.xlu0 0
          %572 = vperm.xlu0 %571, %v564
          %v573 = vpop.permute.xlu0 %572
          %vm575 = vcmask 64512
          %v577 = vsel %vm575, %v561, 0
          %v580 = vsel %vm575, %v562, 0
          %582 = vmatprep.subr.mxu0 0.0
          %583 = vmatpush1.msra.mxu0 %v560
          %584 = vmatprep.subr.mxu0 0.0
          %585 = vmatpush1.msra.mxu0 0.0
          %586 = vmatprep.subr.mxu0 0.0
          %587 = vmatpush1.msra.mxu0 0.0
          %588 = vmatprep.subr.mxu0 0.0
          %589 = vmatpush1.msra.mxu0 0.0
          %590 = vmatprep.subr.mxu0 0.0
          %591 = vmatpush1.msra.mxu0 0.0
          %592 = vmatprep.subr.mxu0 0.0
          %593 = vmatpush1.msra.mxu0 0.0
          %594 = vmatprep.subr.mxu0 0.0
          %595 = vmatpush1.msra.mxu0 0.0
          %596 = vmatprep.subr.mxu0 0.0
          %597 = vmatpush1.msra.mxu0 0.0
          %598 = vmatprep.subr.mxu0 0.0
          %599 = vmatpush1.msra.mxu0 0.0
          %600 = vmatprep.subr.mxu0 0.0
          %601 = vmatpush1.msra.mxu0 0.0
          %602 = vmatprep.subr.mxu0 0.0
          %603 = vmatpush1.msra.mxu0 0.0
          %604 = vmatprep.subr.mxu0 0.0
          %605 = vmatpush1.msra.mxu0 0.0
          %606 = vmatprep.subr.mxu0 0.0
          %607 = vmatpush1.msra.mxu0 0.0
          %608 = vmatprep.subr.mxu0 0.0
          %609 = vmatpush1.msra.mxu0 0.0
          %610 = vmatprep.subr.mxu0 0.0
          %611 = vmatpush1.msra.mxu0 0.0
          %612 = vmatprep.subr.mxu0 0.0
          %613 = vmatpush1.msra.mxu0 0.0
          %614 = vmatprep.subr.mxu0 0.0
          %615 = vmatpush1.msra.mxu0 0.0
          %616 = vmatprep.subr.mxu0 0.0
          %617 = vmatpush1.msra.mxu0 0.0
          %618 = vmatprep.subr.mxu0 0.0
          %619 = vmatpush1.msra.mxu0 0.0
          %620 = vmatprep.subr.mxu0 0.0
          %621 = vmatpush1.msra.mxu0 0.0
          %622 = vmatprep.subr.mxu0 0.0
          %623 = vmatpush1.msra.mxu0 0.0
          %624 = vmatprep.subr.mxu0 0.0
          %625 = vmatpush1.msra.mxu0 0.0
          %626 = vmatprep.subr.mxu0 0.0
          %627 = vmatpush1.msra.mxu0 0.0
          %628 = vmatprep.subr.mxu0 0.0
          %629 = vmatpush1.msra.mxu0 0.0
          %630 = vmatprep.subr.mxu0 0.0
          %631 = vmatpush1.msra.mxu0 0.0
          %632 = vmatprep.subr.mxu0 0.0
          %633 = vmatpush1.msra.mxu0 0.0
          %634 = vmatprep.subr.mxu0 0.0
          %635 = vmatpush1.msra.mxu0 0.0
          %636 = vmatprep.subr.mxu0 0.0
          %637 = vmatpush1.msra.mxu0 0.0
          %638 = vmatprep.subr.mxu0 0.0
          %639 = vmatpush1.msra.mxu0 0.0
          %640 = vmatprep.subr.mxu0 0.0
          %641 = vmatpush1.msra.mxu0 0.0
          %642 = vmatprep.subr.mxu0 0.0
          %643 = vmatpush1.msra.mxu0 0.0
          %644 = vmatprep.subr.mxu0 0.0
          %645 = vmatpush1.msra.mxu0 0.0
          %646 = vmatprep.mubr.f32.mxu0 0.0
          %647 = vmatmul.mubr.f32.gmra.mrb[0].mxu0 %v577
          %v648 = vpop.f32.mrb[0].mxu0
          %v649 = vadd.f32 %v568, %v648
          %v650 = vpop.f32.mrb[0].mxu0
          %651 = vmatprep.mubr.f32.mxu0 0.0
          %652 = vmatmul.mubr.f32.gmra.mrb[0].mxu0 %v580
          %v653 = vpop.f32.mrb[0].mxu0
          %v654 = vadd.f32 %v573, %v653
          %v655 = vpop.f32.mrb[0].mxu0
          %656 = vdwg.mxu0
          %657 = vst [vmem:[#allocation2] sm:$0xff] %v649
          %658 = vst [vmem:[#allocation2 + $0x8] sm:$0xff] %v654
          %659 = vst [vmem:[#allocation3] sm:$0xff] 0.0
          %660 = vst [vmem:[#allocation3 + $0x8] sm:$0xff] 0.0
        $region72: #{tpu_custom_call.1} parent=63 // pred_fallthru
          _
        %v661 = vlaneseq
        %v662 = vand.u32 %v661, 127
        %v663 = vld [vmem:[#allocation2] sm:$0xff]
        %v664 = vld [vmem:[#allocation2 + $0x8] sm:$0xff]
        %v665 = vld [vmem:[#allocation3] sm:$0xff]
        %v666 = vld [vmem:[#allocation3 + $0x8] sm:$0xff]
        %v667 = vld [vmem:[%s492] sm:$0xff]
        %v668 = vld [vmem:[%s492 + $0x8] sm:$0xff]
        %v669 = vld [vmem:[%s492 + $0x10] sm:$0xff]
        %v670 = vld [vmem:[%s492 + $0x18] sm:$0xff]
        %s671 = smul.u32 %s31, 4
        %s672 = sld [smem:[#allocation4 + %s671]]
        %s673 = sadd.s32 %s671, 1
        %s674 = sld [smem:[#allocation4 + %s673]]
        %v675 = vld [vmem:[%s485] sm:$0xff]
        %v676 = vld [vmem:[%s485 + $0x8] sm:$0xff]
        %v677 = vld [vmem:[%s485 + $0x10] sm:$0xff]
        %v678 = vld [vmem:[%s485 + $0x18] sm:$0xff]
        %680 = vset.pattern.permute.xlu0 0
        %681 = vperm.xlu0 %680, %v667
        %v682 = vpop.permute.xlu0 %681
        %685 = vset.pattern.permute.xlu0 0
        %686 = vperm.xlu0 %685, %v668
        %v687 = vpop.permute.xlu0 %686
        %690 = vset.pattern.permute.xlu0 0
        %691 = vperm.xlu0 %690, %v669
        %v692 = vpop.permute.xlu0 %691
        %695 = vset.pattern.permute.xlu0 0
        %696 = vperm.xlu0 %695, %v670
        %v697 = vpop.permute.xlu0 %696
        %vm699 = vcmask 130048
        %v701 = vsel %vm699, %v675, 0
        %v704 = vsel %vm699, %v676, 0
        %v707 = vsel %vm699, %v677, 0
        %v710 = vsel %vm699, %v678, 0
        %712 = vmatprep.subr.mxu0 0.0
        %713 = vmatpush1.msra.mxu0 %v663
        %714 = vmatprep.subr.mxu0 0.0
        %715 = vmatpush1.msra.mxu0 %v664
        %716 = vmatprep.subr.mxu0 0.0
        %717 = vmatpush1.msra.mxu0 0.0
        %718 = vmatprep.subr.mxu0 0.0
        %719 = vmatpush1.msra.mxu0 0.0
        %720 = vmatprep.subr.mxu0 0.0
        %721 = vmatpush1.msra.mxu0 0.0
        %722 = vmatprep.subr.mxu0 0.0
        %723 = vmatpush1.msra.mxu0 0.0
        %724 = vmatprep.subr.mxu0 0.0
        %725 = vmatpush1.msra.mxu0 0.0
        %726 = vmatprep.subr.mxu0 0.0
        %727 = vmatpush1.msra.mxu0 0.0
        %728 = vmatprep.subr.mxu0 0.0
        %729 = vmatpush1.msra.mxu0 0.0
        %730 = vmatprep.subr.mxu0 0.0
        %731 = vmatpush1.msra.mxu0 0.0
        %732 = vmatprep.subr.mxu0 0.0
        %733 = vmatpush1.msra.mxu0 0.0
        %734 = vmatprep.subr.mxu0 0.0
        %735 = vmatpush1.msra.mxu0 0.0
        %736 = vmatprep.subr.mxu0 0.0
        %737 = vmatpush1.msra.mxu0 0.0
        %738 = vmatprep.subr.mxu0 0.0
        %739 = vmatpush1.msra.mxu0 0.0
        %740 = vmatprep.subr.mxu0 0.0
        %741 = vmatpush1.msra.mxu0 0.0
        %742 = vmatprep.subr.mxu0 0.0
        %743 = vmatpush1.msra.mxu0 0.0
        %744 = vmatprep.subr.mxu0 0.0
        %745 = vmatpush1.msra.mxu0 0.0
        %746 = vmatprep.subr.mxu0 0.0
        %747 = vmatpush1.msra.mxu0 0.0
        %748 = vmatprep.subr.mxu0 0.0
        %749 = vmatpush1.msra.mxu0 0.0
        %750 = vmatprep.subr.mxu0 0.0
        %751 = vmatpush1.msra.mxu0 0.0
        %752 = vmatprep.subr.mxu0 0.0
        %753 = vmatpush1.msra.mxu0 0.0
        %754 = vmatprep.subr.mxu0 0.0
        %755 = vmatpush1.msra.mxu0 0.0
        %756 = vmatprep.subr.mxu0 0.0
        %757 = vmatpush1.msra.mxu0 0.0
        %758 = vmatprep.subr.mxu0 0.0
        %759 = vmatpush1.msra.mxu0 0.0
        %760 = vmatprep.subr.mxu0 0.0
        %761 = vmatpush1.msra.mxu0 0.0
        %762 = vmatprep.subr.mxu0 0.0
        %763 = vmatpush1.msra.mxu0 0.0
        %764 = vmatprep.subr.mxu0 0.0
        %765 = vmatpush1.msra.mxu0 0.0
        %766 = vmatprep.subr.mxu0 0.0
        %767 = vmatpush1.msra.mxu0 0.0
        %768 = vmatprep.subr.mxu0 0.0
        %769 = vmatpush1.msra.mxu0 0.0
        %770 = vmatprep.subr.mxu0 0.0
        %771 = vmatpush1.msra.mxu0 0.0
        %772 = vmatprep.subr.mxu0 0.0
        %773 = vmatpush1.msra.mxu0 0.0
        %774 = vmatprep.subr.mxu0 0.0
        %775 = vmatpush1.msra.mxu0 0.0
        %776 = vmatprep.mubr.f32.mxu0 0.0
        %777 = vmatmul.mubr.f32.gmra.mrb[0].mxu0 %v701
        %v778 = vpop.f32.mrb[0].mxu0
        %v779 = vadd.f32 %v682, %v778
        %v780 = vpop.f32.mrb[0].mxu0
        %781 = vmatprep.mubr.f32.mxu0 0.0
        %782 = vmatmul.mubr.f32.gmra.mrb[0].mxu0 %v704
        %v783 = vpop.f32.mrb[0].mxu0
        %v784 = vadd.f32 %v687, %v783
        %v785 = vpop.f32.mrb[0].mxu0
        %786 = vmatprep.mubr.f32.mxu0 0.0
        %787 = vmatmul.mubr.f32.gmra.mrb[0].mxu0 %v707
        %v788 = vpop.f32.mrb[0].mxu0
        %v789 = vadd.f32 %v692, %v788
        %v790 = vpop.f32.mrb[0].mxu0
        %791 = vmatprep.mubr.f32.mxu0 0.0
        %792 = vmatmul.mubr.f32.gmra.mrb[0].mxu0 %v710
        %v793 = vpop.f32.mrb[0].mxu0
        %v794 = vadd.f32 %v697, %v793
        %v795 = vpop.f32.mrb[0].mxu0
        %796 = vdwg.mxu0
        %vm797 = vcmp.gt.f32.partialorder %v779, 0.0
        %vm798 = vcmp.gt.f32.partialorder %v784, 0.0
        %vm799 = vcmp.gt.f32.partialorder %v789, 0.0
        %vm800 = vcmp.gt.f32.partialorder %v794, 0.0
        %v801 = vstv %s672
        %v802 = vmul.f32 %v801, %v779
        %v803 = vmul.f32 %v801, %v784
        %v804 = vmul.f32 %v801, %v789
        %v805 = vmul.f32 %v801, %v794
        %v806 = vsel %vm797, %v779, %v802
        %v807 = vsel %vm798, %v784, %v803
        %v808 = vsel %vm799, %v789, %v804
        %v809 = vsel %vm800, %v794, %v805
        %v810 = vadd.f32 %v806, %v807
        %v811 = vadd.f32 %v810, %v808
        %v812 = vadd.f32 %v811, %v809
        %813 = vadd.xlane.f32.xlu0 %v812
        %v814 = vpop.xlane.xlu0 %813
        %v815 = vrot.slane %v814, 4
        %v816 = vadd.f32 %v814, %v815
        %v817 = vrot.slane %v816, 2
        %v818 = vadd.f32 %v816, %v817
        %v819 = vrot.slane %v818, 1
        %v820 = vadd.f32 %v818, %v819
        %s821 = vtos %v820
        %v822 = vmul.f32 %v806, %v806
        %v823 = vmul.f32 %v807, %v807
        %v824 = vmul.f32 %v808, %v808
        %v825 = vmul.f32 %v809, %v809
        %v826 = vadd.f32 %v822, %v823
        %v827 = vadd.f32 %v826, %v824
        %v828 = vadd.f32 %v827, %v825
        %829 = vadd.xlane.f32.xlu0 %v828
        %v830 = vpop.xlane.xlu0 %829
        %v831 = vrot.slane %v830, 4
        %v832 = vadd.f32 %v830, %v831
        %v833 = vrot.slane %v832, 2
        %v834 = vadd.f32 %v832, %v833
        %v835 = vrot.slane %v834, 1
        %v836 = vadd.f32 %v834, %v835
        %s837 = vtos %v836
        %v838 = vrcp.pop 4096.0
        %s839 = vtos %v838
        %s840 = smul.f32 %s821, %s839
        %v841 = vrcp.pop 4096.0
        %s842 = vtos %v841
        %s843 = smul.f32 %s837, %s842
        %s844 = smul.f32 %s840, %s840
        %s845 = ssub.f32 %s843, %s844
        %s846 = smax.f32 %s845, 0.0
        %v847 = vstv %s840
        %v848 = vsub.f32 %v806, %v847
        %v849 = vsub.f32 %v807, %v847
        %v850 = vsub.f32 %v808, %v847
        %v851 = vsub.f32 %v809, %v847
        %s852 = sadd.f32 %s846, 1e-08
        %v853 = vstv %s852
        %v854 = vrsqrt.pop %v853
        %s855 = vtos %v854
        %v856 = vstv %s855
        %v857 = vmul.f32 %v848, %v856
        %v858 = vmul.f32 %v849, %v856
        %v859 = vmul.f32 %v850, %v856
        %v860 = vmul.f32 %v851, %v856
        %861 = vset.pattern.permute.xlu0 1
        %862 = vperm.xlu0 %861, %v667
        %v863 = vpop.permute.xlu0 %862
        %865 = vset.pattern.permute.xlu0 1
        %866 = vperm.xlu0 %865, %v668
        %v867 = vpop.permute.xlu0 %866
        %869 = vset.pattern.permute.xlu0 1
        %870 = vperm.xlu0 %869, %v669
        %v871 = vpop.permute.xlu0 %870
        %873 = vset.pattern.permute.xlu0 1
        %874 = vperm.xlu0 %873, %v670
        %v875 = vpop.permute.xlu0 %874
        %v877 = vmul.f32 %v857, %v863
        %v878 = vmul.f32 %v858, %v867
        %v879 = vmul.f32 %v859, %v871
        %v880 = vmul.f32 %v860, %v875
        %881 = vset.pattern.permute.xlu0 2
        %882 = vperm.xlu0 %881, %v667
        %v883 = vpop.permute.xlu0 %882
        %885 = vset.pattern.permute.xlu0 2
        %886 = vperm.xlu0 %885, %v668
        %v887 = vpop.permute.xlu0 %886
        %889 = vset.pattern.permute.xlu0 2
        %890 = vperm.xlu0 %889, %v669
        %v891 = vpop.permute.xlu0 %890
        %893 = vset.pattern.permute.xlu0 2
        %894 = vperm.xlu0 %893, %v670
        %v895 = vpop.permute.xlu0 %894
        %v897 = vadd.f32 %v877, %v883
        %v898 = vadd.f32 %v878, %v887
        %v899 = vadd.f32 %v879, %v891
        %v900 = vadd.f32 %v880, %v895
        %vm901 = vcmp.ge.s32.totalorder %v662, 1
        %902 = vrot.lane.b32.xlu0 %v897, 1
        %v903 = vpop.permute.xlu0 %902
        %904 = vrot.lane.b32.xlu0 %v898, 1
        %v905 = vpop.permute.xlu0 %904
        %906 = vrot.lane.b32.xlu0 %v899, 1
        %v907 = vpop.permute.xlu0 %906
        %908 = vrot.lane.b32.xlu0 %v900, 1
        %v909 = vpop.permute.xlu0 %908
        %v910 = vsel %vm901, %v903, 0.0
        %v911 = vsel %vm901, %v905, 0.0
        %v912 = vsel %vm901, %v907, 0.0
        %v913 = vsel %vm901, %v909, 0.0
        %vm914 = vcmp.lt.s32.totalorder %v662, 127
        %915 = vrot.lane.b32.xlu0 %v897, 127
        %v916 = vpop.permute.xlu0 %915
        %917 = vrot.lane.b32.xlu0 %v898, 127
        %v918 = vpop.permute.xlu0 %917
        %919 = vrot.lane.b32.xlu0 %v899, 127
        %v920 = vpop.permute.xlu0 %919
        %921 = vrot.lane.b32.xlu0 %v900, 127
        %v922 = vpop.permute.xlu0 %921
        %v923 = vsel %vm914, %v916, 0.0
        %v924 = vsel %vm914, %v918, 0.0
        %v925 = vsel %vm914, %v920, 0.0
        %v926 = vsel %vm914, %v922, 0.0
        %927 = vset.pattern.permute.xlu0 6
        %928 = vperm.xlu0 %927, %v667
        %v929 = vpop.permute.xlu0 %928
        %931 = vset.pattern.permute.xlu0 6
        %932 = vperm.xlu0 %931, %v668
        %v933 = vpop.permute.xlu0 %932
        %935 = vset.pattern.permute.xlu0 6
        %936 = vperm.xlu0 %935, %v669
        %v937 = vpop.permute.xlu0 %936
        %939 = vset.pattern.permute.xlu0 6
        %940 = vperm.xlu0 %939, %v670
        %v941 = vpop.permute.xlu0 %940
        %v943 = vmul.f32 %v929, %v910
        %v944 = vmul.f32 %v933, %v911
        %v945 = vmul.f32 %v937, %v912
        %v946 = vmul.f32 %v941, %v913
        %947 = vset.pattern.permute.xlu0 7
        %948 = vperm.xlu0 %947, %v667
        %v949 = vpop.permute.xlu0 %948
        %951 = vset.pattern.permute.xlu0 7
        %952 = vperm.xlu0 %951, %v668
        %v953 = vpop.permute.xlu0 %952
        %955 = vset.pattern.permute.xlu0 7
        %956 = vperm.xlu0 %955, %v669
        %v957 = vpop.permute.xlu0 %956
        %959 = vset.pattern.permute.xlu0 7
        %960 = vperm.xlu0 %959, %v670
        %v961 = vpop.permute.xlu0 %960
        %v963 = vmul.f32 %v949, %v897
        %v964 = vmul.f32 %v953, %v898
        %v965 = vmul.f32 %v957, %v899
        %v966 = vmul.f32 %v961, %v900
        %v967 = vadd.f32 %v943, %v963
        %v968 = vadd.f32 %v944, %v964
        %v969 = vadd.f32 %v945, %v965
        %v970 = vadd.f32 %v946, %v966
        %971 = vset.pattern.permute.xlu0 8
        %972 = vperm.xlu0 %971, %v667
        %v973 = vpop.permute.xlu0 %972
        %975 = vset.pattern.permute.xlu0 8
        %976 = vperm.xlu0 %975, %v668
        %v977 = vpop.permute.xlu0 %976
        %979 = vset.pattern.permute.xlu0 8
        %980 = vperm.xlu0 %979, %v669
        %v981 = vpop.permute.xlu0 %980
        %983 = vset.pattern.permute.xlu0 8
        %984 = vperm.xlu0 %983, %v670
        %v985 = vpop.permute.xlu0 %984
        %v987 = vmul.f32 %v973, %v923
        %v988 = vmul.f32 %v977, %v924
        %v989 = vmul.f32 %v981, %v925
        %v990 = vmul.f32 %v985, %v926
        %v991 = vadd.f32 %v967, %v987
        %v992 = vadd.f32 %v968, %v988
        %v993 = vadd.f32 %v969, %v989
        %v994 = vadd.f32 %v970, %v990
        %995 = vset.pattern.permute.xlu0 3
        %996 = vperm.xlu0 %995, %v667
        %v997 = vpop.permute.xlu0 %996
        %999 = vset.pattern.permute.xlu0 3
        %1000 = vperm.xlu0 %999, %v668
        %v1001 = vpop.permute.xlu0 %1000
        %1003 = vset.pattern.permute.xlu0 3
        %1004 = vperm.xlu0 %1003, %v669
        %v1005 = vpop.permute.xlu0 %1004
        %1007 = vset.pattern.permute.xlu0 3
        %1008 = vperm.xlu0 %1007, %v670
        %v1009 = vpop.permute.xlu0 %1008
        %v1011 = vadd.f32 %v991, %v997
        %v1012 = vadd.f32 %v992, %v1001
        %v1013 = vadd.f32 %v993, %v1005
        %v1014 = vadd.f32 %v994, %v1009
        %vm1015 = vcmp.gt.f32.partialorder %v1011, 0.0
        %vm1016 = vcmp.gt.f32.partialorder %v1012, 0.0
        %vm1017 = vcmp.gt.f32.partialorder %v1013, 0.0
        %vm1018 = vcmp.gt.f32.partialorder %v1014, 0.0
        %v1019 = vstv %s674
        %v1020 = vmul.f32 %v1019, %v1011
        %v1021 = vmul.f32 %v1019, %v1012
        %v1022 = vmul.f32 %v1019, %v1013
        %v1023 = vmul.f32 %v1019, %v1014
        %v1024 = vsel %vm1015, %v1011, %v1020
        %v1025 = vsel %vm1016, %v1012, %v1021
        %v1026 = vsel %vm1017, %v1013, %v1022
        %v1027 = vsel %vm1018, %v1014, %v1023
        %v1028 = vadd.f32 %v1024, %v1025
        %v1029 = vadd.f32 %v1028, %v1026
        %v1030 = vadd.f32 %v1029, %v1027
        %1031 = vadd.xlane.f32.xlu0 %v1030
        %v1032 = vpop.xlane.xlu0 %1031
        %v1033 = vrot.slane %v1032, 4
        %v1034 = vadd.f32 %v1032, %v1033
        %v1035 = vrot.slane %v1034, 2
        %v1036 = vadd.f32 %v1034, %v1035
        %v1037 = vrot.slane %v1036, 1
        %v1038 = vadd.f32 %v1036, %v1037
        %s1039 = vtos %v1038
        %v1040 = vmul.f32 %v1024, %v1024
        %v1041 = vmul.f32 %v1025, %v1025
        %v1042 = vmul.f32 %v1026, %v1026
        %v1043 = vmul.f32 %v1027, %v1027
        %v1044 = vadd.f32 %v1040, %v1041
        %v1045 = vadd.f32 %v1044, %v1042
        %v1046 = vadd.f32 %v1045, %v1043
        %1047 = vadd.xlane.f32.xlu0 %v1046
        %v1048 = vpop.xlane.xlu0 %1047
        %v1049 = vrot.slane %v1048, 4
        %v1050 = vadd.f32 %v1048, %v1049
        %v1051 = vrot.slane %v1050, 2
        %v1052 = vadd.f32 %v1050, %v1051
        %v1053 = vrot.slane %v1052, 1
        %v1054 = vadd.f32 %v1052, %v1053
        %s1055 = vtos %v1054
        %v1056 = vrcp.pop 4096.0
        %s1057 = vtos %v1056
        %s1058 = smul.f32 %s1039, %s1057
        %v1059 = vrcp.pop 4096.0
        %s1060 = vtos %v1059
        %s1061 = smul.f32 %s1055, %s1060
        %s1062 = smul.f32 %s1058, %s1058
        %s1063 = ssub.f32 %s1061, %s1062
        %s1064 = smax.f32 %s1063, 0.0
        %v1065 = vstv %s1058
        %v1066 = vsub.f32 %v1024, %v1065
        %v1067 = vsub.f32 %v1025, %v1065
        %v1068 = vsub.f32 %v1026, %v1065
        %v1069 = vsub.f32 %v1027, %v1065
        %s1070 = sadd.f32 %s1064, 1e-08
        %v1071 = vstv %s1070
        %v1072 = vrsqrt.pop %v1071
        %s1073 = vtos %v1072
        %v1074 = vstv %s1073
        %v1075 = vmul.f32 %v1066, %v1074
        %v1076 = vmul.f32 %v1067, %v1074
        %v1077 = vmul.f32 %v1068, %v1074
        %v1078 = vmul.f32 %v1069, %v1074
        %1079 = vset.pattern.permute.xlu0 4
        %1080 = vperm.xlu0 %1079, %v667
        %v1081 = vpop.permute.xlu0 %1080
        %1083 = vset.pattern.permute.xlu0 4
        %1084 = vperm.xlu0 %1083, %v668
        %v1085 = vpop.permute.xlu0 %1084
        %1087 = vset.pattern.permute.xlu0 4
        %1088 = vperm.xlu0 %1087, %v669
        %v1089 = vpop.permute.xlu0 %1088
        %1091 = vset.pattern.permute.xlu0 4
        %1092 = vperm.xlu0 %1091, %v670
        %v1093 = vpop.permute.xlu0 %1092
        %v1095 = vmul.f32 %v1075, %v1081
        %v1096 = vmul.f32 %v1076, %v1085
        %v1097 = vmul.f32 %v1077, %v1089
        %v1098 = vmul.f32 %v1078, %v1093
        %1099 = vset.pattern.permute.xlu0 5
        %1100 = vperm.xlu0 %1099, %v667
        %v1101 = vpop.permute.xlu0 %1100
        %1103 = vset.pattern.permute.xlu0 5
        %1104 = vperm.xlu0 %1103, %v668
        %v1105 = vpop.permute.xlu0 %1104
        %1107 = vset.pattern.permute.xlu0 5
        %1108 = vperm.xlu0 %1107, %v669
        %v1109 = vpop.permute.xlu0 %1108
        %1111 = vset.pattern.permute.xlu0 5
        %1112 = vperm.xlu0 %1111, %v670
        %v1113 = vpop.permute.xlu0 %1112
        %v1115 = vadd.f32 %v1095, %v1101
        %v1116 = vadd.f32 %v1096, %v1105
        %v1117 = vadd.f32 %v1097, %v1109
        %v1118 = vadd.f32 %v1098, %v1113
        %v1119 = vld [vmem:[%s499] sm:$0xff]
        %v1120 = vld [vmem:[%s499 + $0x8] sm:$0xff]
        %v1121 = vld [vmem:[%s499 + $0x10] sm:$0xff]
        %v1122 = vld [vmem:[%s499 + $0x18] sm:$0xff]
        %vm1123 = vcmask 261120
        %v1125 = vsel %vm1123, %v1119, 0
        %v1128 = vsel %vm1123, %v1120, 0
        %v1131 = vsel %vm1123, %v1121, 0
        %v1134 = vsel %vm1123, %v1122, 0
        %1136 = vmatprep.subr.mxu0 0.0
        %1137 = vmatpush1.msra.mxu0 %v1115
        %1138 = vmatprep.subr.mxu0 0.0
        %1139 = vmatpush1.msra.mxu0 %v1116
        %1140 = vmatprep.subr.mxu0 0.0
        %1141 = vmatpush1.msra.mxu0 %v1117
        %1142 = vmatprep.subr.mxu0 0.0
        %1143 = vmatpush1.msra.mxu0 %v1118
        %1144 = vmatprep.subr.mxu0 0.0
        %1145 = vmatpush1.msra.mxu0 0.0
        %1146 = vmatprep.subr.mxu0 0.0
        %1147 = vmatpush1.msra.mxu0 0.0
        %1148 = vmatprep.subr.mxu0 0.0
        %1149 = vmatpush1.msra.mxu0 0.0
        %1150 = vmatprep.subr.mxu0 0.0
        %1151 = vmatpush1.msra.mxu0 0.0
        %1152 = vmatprep.subr.mxu0 0.0
        %1153 = vmatpush1.msra.mxu0 0.0
        %1154 = vmatprep.subr.mxu0 0.0
        %1155 = vmatpush1.msra.mxu0 0.0
        %1156 = vmatprep.subr.mxu0 0.0
        %1157 = vmatpush1.msra.mxu0 0.0
        %1158 = vmatprep.subr.mxu0 0.0
        %1159 = vmatpush1.msra.mxu0 0.0
        %1160 = vmatprep.subr.mxu0 0.0
        %1161 = vmatpush1.msra.mxu0 0.0
        %1162 = vmatprep.subr.mxu0 0.0
        %1163 = vmatpush1.msra.mxu0 0.0
        %1164 = vmatprep.subr.mxu0 0.0
        %1165 = vmatpush1.msra.mxu0 0.0
        %1166 = vmatprep.subr.mxu0 0.0
        %1167 = vmatpush1.msra.mxu0 0.0
        %1168 = vmatprep.subr.mxu0 0.0
        %1169 = vmatpush1.msra.mxu0 0.0
        %1170 = vmatprep.subr.mxu0 0.0
        %1171 = vmatpush1.msra.mxu0 0.0
        %1172 = vmatprep.subr.mxu0 0.0
        %1173 = vmatpush1.msra.mxu0 0.0
        %1174 = vmatprep.subr.mxu0 0.0
        %1175 = vmatpush1.msra.mxu0 0.0
        %1176 = vmatprep.subr.mxu0 0.0
        %1177 = vmatpush1.msra.mxu0 0.0
        %1178 = vmatprep.subr.mxu0 0.0
        %1179 = vmatpush1.msra.mxu0 0.0
        %1180 = vmatprep.subr.mxu0 0.0
        %1181 = vmatpush1.msra.mxu0 0.0
        %1182 = vmatprep.subr.mxu0 0.0
        %1183 = vmatpush1.msra.mxu0 0.0
        %1184 = vmatprep.subr.mxu0 0.0
        %1185 = vmatpush1.msra.mxu0 0.0
        %1186 = vmatprep.subr.mxu0 0.0
        %1187 = vmatpush1.msra.mxu0 0.0
        %1188 = vmatprep.subr.mxu0 0.0
        %1189 = vmatpush1.msra.mxu0 0.0
        %1190 = vmatprep.subr.mxu0 0.0
        %1191 = vmatpush1.msra.mxu0 0.0
        %1192 = vmatprep.subr.mxu0 0.0
        %1193 = vmatpush1.msra.mxu0 0.0
        %1194 = vmatprep.subr.mxu0 0.0
        %1195 = vmatpush1.msra.mxu0 0.0
        %1196 = vmatprep.subr.mxu0 0.0
        %1197 = vmatpush1.msra.mxu0 0.0
        %1198 = vmatprep.subr.mxu0 0.0
        %1199 = vmatpush1.msra.mxu0 0.0
        %1200 = vmatprep.mubr.f32.mxu0 0.0
        %1201 = vmatmul.mubr.f32.gmra.mrb[0].mxu0 %v1125
        %v1202 = vpop.f32.mrb[0].mxu0
        %v1203 = vadd.f32 0.0, %v1202
        %v1204 = vpop.f32.mrb[0].mxu0
        %1205 = vmatprep.mubr.f32.mxu0 0.0
        %1206 = vmatmul.mubr.f32.gmra.mrb[0].mxu0 %v1128
        %v1207 = vpop.f32.mrb[0].mxu0
        %v1208 = vadd.f32 0.0, %v1207
        %v1209 = vpop.f32.mrb[0].mxu0
        %1210 = vmatprep.mubr.f32.mxu0 0.0
        %1211 = vmatmul.mubr.f32.gmra.mrb[0].mxu0 %v1131
        %v1212 = vpop.f32.mrb[0].mxu0
        %v1213 = vadd.f32 0.0, %v1212
        %v1214 = vpop.f32.mrb[0].mxu0
        %1215 = vmatprep.mubr.f32.mxu0 0.0
        %1216 = vmatmul.mubr.f32.gmra.mrb[0].mxu0 %v1134
        %v1217 = vpop.f32.mrb[0].mxu0
        %v1218 = vadd.f32 0.0, %v1217
        %v1219 = vpop.f32.mrb[0].mxu0
        %1220 = vdwg.mxu0
        %v1221 = vld [vmem:[%s506] sm:$0xff]
        %v1222 = vld [vmem:[%s506 + $0x8] sm:$0xff]
        %v1223 = vadd.f32 %v663, %v1203
        %v1224 = vadd.f32 %v664, %v1208
        %1226 = vset.pattern.permute.xlu0 0
        %1227 = vperm.xlu0 %1226, %v1221
        %v1228 = vpop.permute.xlu0 %1227
        %1231 = vset.pattern.permute.xlu0 0
        %1232 = vperm.xlu0 %1231, %v1222
        %v1233 = vpop.permute.xlu0 %1232
        %v1235 = vadd.f32 %v1223, %v1228
        %v1236 = vadd.f32 %v1224, %v1233
        %v1237 = vadd.f32 %v665, %v1213
        %v1238 = vadd.f32 %v666, %v1218
        %1239 = vset.pattern.permute.xlu0 1
        %1240 = vperm.xlu0 %1239, %v1221
        %v1241 = vpop.permute.xlu0 %1240
        %1243 = vset.pattern.permute.xlu0 1
        %1244 = vperm.xlu0 %1243, %v1222
        %v1245 = vpop.permute.xlu0 %1244
        %v1247 = vadd.f32 %v1237, %v1241
        %v1248 = vadd.f32 %v1238, %v1245
        %s1249 = scalar_lea.vmem %s492, 32
        %v1250 = vld [vmem:[%s1249] sm:$0xff]
        %v1251 = vld [vmem:[%s1249 + $0x8] sm:$0xff]
        %v1252 = vld [vmem:[%s1249 + $0x10] sm:$0xff]
        %v1253 = vld [vmem:[%s1249 + $0x18] sm:$0xff]
        %s1254 = smul.u32 %s31, 2
        %s1255 = sadd.s32 %s1254, 1
        %s1256 = smul.u32 %s1255, 2
        %s1257 = sld [smem:[#allocation4 + %s1256]]
        %s1258 = sadd.s32 %s1256, 1
        %s1259 = sld [smem:[#allocation4 + %s1258]]
        %s1260 = scalar_lea.vmem %s485, 32
        %v1261 = vld [vmem:[%s1260] sm:$0xff]
        %v1262 = vld [vmem:[%s1260 + $0x8] sm:$0xff]
        %v1263 = vld [vmem:[%s1260 + $0x10] sm:$0xff]
        %v1264 = vld [vmem:[%s1260 + $0x18] sm:$0xff]
        %1266 = vset.pattern.permute.xlu0 0
        %1267 = vperm.xlu0 %1266, %v1250
        %v1268 = vpop.permute.xlu0 %1267
        %1271 = vset.pattern.permute.xlu0 0
        %1272 = vperm.xlu0 %1271, %v1251
        %v1273 = vpop.permute.xlu0 %1272
        %1276 = vset.pattern.permute.xlu0 0
        %1277 = vperm.xlu0 %1276, %v1252
        %v1278 = vpop.permute.xlu0 %1277
        %1281 = vset.pattern.permute.xlu0 0
        %1282 = vperm.xlu0 %1281, %v1253
        %v1283 = vpop.permute.xlu0 %1282
        %v1286 = vsel %vm699, %v1261, 0
        %v1289 = vsel %vm699, %v1262, 0
        %v1292 = vsel %vm699, %v1263, 0
        %v1295 = vsel %vm699, %v1264, 0
        %1297 = vmatprep.subr.mxu0 0.0
        %1298 = vmatpush1.msra.mxu0 %v1235
        %1299 = vmatprep.subr.mxu0 0.0
        %1300 = vmatpush1.msra.mxu0 %v1236
        %1301 = vmatprep.subr.mxu0 0.0
        %1302 = vmatpush1.msra.mxu0 0.0
        %1303 = vmatprep.subr.mxu0 0.0
        %1304 = vmatpush1.msra.mxu0 0.0
        %1305 = vmatprep.subr.mxu0 0.0
        %1306 = vmatpush1.msra.mxu0 0.0
        %1307 = vmatprep.subr.mxu0 0.0
        %1308 = vmatpush1.msra.mxu0 0.0
        %1309 = vmatprep.subr.mxu0 0.0
        %1310 = vmatpush1.msra.mxu0 0.0
        %1311 = vmatprep.subr.mxu0 0.0
        %1312 = vmatpush1.msra.mxu0 0.0
        %1313 = vmatprep.subr.mxu0 0.0
        %1314 = vmatpush1.msra.mxu0 0.0
        %1315 = vmatprep.subr.mxu0 0.0
        %1316 = vmatpush1.msra.mxu0 0.0
        %1317 = vmatprep.subr.mxu0 0.0
        %1318 = vmatpush1.msra.mxu0 0.0
        %1319 = vmatprep.subr.mxu0 0.0
        %1320 = vmatpush1.msra.mxu0 0.0
        %1321 = vmatprep.subr.mxu0 0.0
        %1322 = vmatpush1.msra.mxu0 0.0
        %1323 = vmatprep.subr.mxu0 0.0
        %1324 = vmatpush1.msra.mxu0 0.0
        %1325 = vmatprep.subr.mxu0 0.0
        %1326 = vmatpush1.msra.mxu0 0.0
        %1327 = vmatprep.subr.mxu0 0.0
        %1328 = vmatpush1.msra.mxu0 0.0
        %1329 = vmatprep.subr.mxu0 0.0
        %1330 = vmatpush1.msra.mxu0 0.0
        %1331 = vmatprep.subr.mxu0 0.0
        %1332 = vmatpush1.msra.mxu0 0.0
        %1333 = vmatprep.subr.mxu0 0.0
        %1334 = vmatpush1.msra.mxu0 0.0
        %1335 = vmatprep.subr.mxu0 0.0
        %1336 = vmatpush1.msra.mxu0 0.0
        %1337 = vmatprep.subr.mxu0 0.0
        %1338 = vmatpush1.msra.mxu0 0.0
        %1339 = vmatprep.subr.mxu0 0.0
        %1340 = vmatpush1.msra.mxu0 0.0
        %1341 = vmatprep.subr.mxu0 0.0
        %1342 = vmatpush1.msra.mxu0 0.0
        %1343 = vmatprep.subr.mxu0 0.0
        %1344 = vmatpush1.msra.mxu0 0.0
        %1345 = vmatprep.subr.mxu0 0.0
        %1346 = vmatpush1.msra.mxu0 0.0
        %1347 = vmatprep.subr.mxu0 0.0
        %1348 = vmatpush1.msra.mxu0 0.0
        %1349 = vmatprep.subr.mxu0 0.0
        %1350 = vmatpush1.msra.mxu0 0.0
        %1351 = vmatprep.subr.mxu0 0.0
        %1352 = vmatpush1.msra.mxu0 0.0
        %1353 = vmatprep.subr.mxu0 0.0
        %1354 = vmatpush1.msra.mxu0 0.0
        %1355 = vmatprep.subr.mxu0 0.0
        %1356 = vmatpush1.msra.mxu0 0.0
        %1357 = vmatprep.subr.mxu0 0.0
        %1358 = vmatpush1.msra.mxu0 0.0
        %1359 = vmatprep.subr.mxu0 0.0
        %1360 = vmatpush1.msra.mxu0 0.0
        %1361 = vmatprep.mubr.f32.mxu0 0.0
        %1362 = vmatmul.mubr.f32.gmra.mrb[0].mxu0 %v1286
        %v1363 = vpop.f32.mrb[0].mxu0
        %v1364 = vadd.f32 %v1268, %v1363
        %v1365 = vpop.f32.mrb[0].mxu0
        %1366 = vmatprep.mubr.f32.mxu0 0.0
        %1367 = vmatmul.mubr.f32.gmra.mrb[0].mxu0 %v1289
        %v1368 = vpop.f32.mrb[0].mxu0
        %v1369 = vadd.f32 %v1273, %v1368
        %v1370 = vpop.f32.mrb[0].mxu0
        %1371 = vmatprep.mubr.f32.mxu0 0.0
        %1372 = vmatmul.mubr.f32.gmra.mrb[0].mxu0 %v1292
        %v1373 = vpop.f32.mrb[0].mxu0
        %v1374 = vadd.f32 %v1278, %v1373
        %v1375 = vpop.f32.mrb[0].mxu0
        %1376 = vmatprep.mubr.f32.mxu0 0.0
        %1377 = vmatmul.mubr.f32.gmra.mrb[0].mxu0 %v1295
        %v1378 = vpop.f32.mrb[0].mxu0
        %v1379 = vadd.f32 %v1283, %v1378
        %v1380 = vpop.f32.mrb[0].mxu0
        %1381 = vdwg.mxu0
        %vm1382 = vcmp.gt.f32.partialorder %v1364, 0.0
        %vm1383 = vcmp.gt.f32.partialorder %v1369, 0.0
        %vm1384 = vcmp.gt.f32.partialorder %v1374, 0.0
        %vm1385 = vcmp.gt.f32.partialorder %v1379, 0.0
        %v1386 = vstv %s1257
        %v1387 = vmul.f32 %v1386, %v1364
        %v1388 = vmul.f32 %v1386, %v1369
        %v1389 = vmul.f32 %v1386, %v1374
        %v1390 = vmul.f32 %v1386, %v1379
        %v1391 = vsel %vm1382, %v1364, %v1387
        %v1392 = vsel %vm1383, %v1369, %v1388
        %v1393 = vsel %vm1384, %v1374, %v1389
        %v1394 = vsel %vm1385, %v1379, %v1390
        %v1395 = vadd.f32 %v1391, %v1392
        %v1396 = vadd.f32 %v1395, %v1393
        %v1397 = vadd.f32 %v1396, %v1394
        %1398 = vadd.xlane.f32.xlu0 %v1397
        %v1399 = vpop.xlane.xlu0 %1398
        %v1400 = vrot.slane %v1399, 4
        %v1401 = vadd.f32 %v1399, %v1400
        %v1402 = vrot.slane %v1401, 2
        %v1403 = vadd.f32 %v1401, %v1402
        %v1404 = vrot.slane %v1403, 1
        %v1405 = vadd.f32 %v1403, %v1404
        %s1406 = vtos %v1405
        %v1407 = vmul.f32 %v1391, %v1391
        %v1408 = vmul.f32 %v1392, %v1392
        %v1409 = vmul.f32 %v1393, %v1393
        %v1410 = vmul.f32 %v1394, %v1394
        %v1411 = vadd.f32 %v1407, %v1408
        %v1412 = vadd.f32 %v1411, %v1409
        %v1413 = vadd.f32 %v1412, %v1410
        %1414 = vadd.xlane.f32.xlu0 %v1413
        %v1415 = vpop.xlane.xlu0 %1414
        %v1416 = vrot.slane %v1415, 4
        %v1417 = vadd.f32 %v1415, %v1416
        %v1418 = vrot.slane %v1417, 2
        %v1419 = vadd.f32 %v1417, %v1418
        %v1420 = vrot.slane %v1419, 1
        %v1421 = vadd.f32 %v1419, %v1420
        %s1422 = vtos %v1421
        %v1423 = vrcp.pop 4096.0
        %s1424 = vtos %v1423
        %s1425 = smul.f32 %s1406, %s1424
        %v1426 = vrcp.pop 4096.0
        %s1427 = vtos %v1426
        %s1428 = smul.f32 %s1422, %s1427
        %s1429 = smul.f32 %s1425, %s1425
        %s1430 = ssub.f32 %s1428, %s1429
        %s1431 = smax.f32 %s1430, 0.0
        %v1432 = vstv %s1425
        %v1433 = vsub.f32 %v1391, %v1432
        %v1434 = vsub.f32 %v1392, %v1432
        %v1435 = vsub.f32 %v1393, %v1432
        %v1436 = vsub.f32 %v1394, %v1432
        %s1437 = sadd.f32 %s1431, 1e-08
        %v1438 = vstv %s1437
        %v1439 = vrsqrt.pop %v1438
        %s1440 = vtos %v1439
        %v1441 = vstv %s1440
        %v1442 = vmul.f32 %v1433, %v1441
        %v1443 = vmul.f32 %v1434, %v1441
        %v1444 = vmul.f32 %v1435, %v1441
        %v1445 = vmul.f32 %v1436, %v1441
        %1446 = vset.pattern.permute.xlu0 1
        %1447 = vperm.xlu0 %1446, %v1250
        %v1448 = vpop.permute.xlu0 %1447
        %1450 = vset.pattern.permute.xlu0 1
        %1451 = vperm.xlu0 %1450, %v1251
        %v1452 = vpop.permute.xlu0 %1451
        %1454 = vset.pattern.permute.xlu0 1
        %1455 = vperm.xlu0 %1454, %v1252
        %v1456 = vpop.permute.xlu0 %1455
        %1458 = vset.pattern.permute.xlu0 1
        %1459 = vperm.xlu0 %1458, %v1253
        %v1460 = vpop.permute.xlu0 %1459
        %v1462 = vmul.f32 %v1442, %v1448
        %v1463 = vmul.f32 %v1443, %v1452
        %v1464 = vmul.f32 %v1444, %v1456
        %v1465 = vmul.f32 %v1445, %v1460
        %1466 = vset.pattern.permute.xlu0 2
        %1467 = vperm.xlu0 %1466, %v1250
        %v1468 = vpop.permute.xlu0 %1467
        %1470 = vset.pattern.permute.xlu0 2
        %1471 = vperm.xlu0 %1470, %v1251
        %v1472 = vpop.permute.xlu0 %1471
        %1474 = vset.pattern.permute.xlu0 2
        %1475 = vperm.xlu0 %1474, %v1252
        %v1476 = vpop.permute.xlu0 %1475
        %1478 = vset.pattern.permute.xlu0 2
        %1479 = vperm.xlu0 %1478, %v1253
        %v1480 = vpop.permute.xlu0 %1479
        %v1482 = vadd.f32 %v1462, %v1468
        %v1483 = vadd.f32 %v1463, %v1472
        %v1484 = vadd.f32 %v1464, %v1476
        %v1485 = vadd.f32 %v1465, %v1480
        %vm1486 = vcmp.ge.s32.totalorder %v662, 2
        %1487 = vrot.lane.b32.xlu0 %v1482, 2
        %v1488 = vpop.permute.xlu0 %1487
        %1489 = vrot.lane.b32.xlu0 %v1483, 2
        %v1490 = vpop.permute.xlu0 %1489
        %1491 = vrot.lane.b32.xlu0 %v1484, 2
        %v1492 = vpop.permute.xlu0 %1491
        %1493 = vrot.lane.b32.xlu0 %v1485, 2
        %v1494 = vpop.permute.xlu0 %1493
        %v1495 = vsel %vm1486, %v1488, 0.0
        %v1496 = vsel %vm1486, %v1490, 0.0
        %v1497 = vsel %vm1486, %v1492, 0.0
        %v1498 = vsel %vm1486, %v1494, 0.0
        %vm1499 = vcmp.lt.s32.totalorder %v662, 126
        %1500 = vrot.lane.b32.xlu0 %v1482, 126
        %v1501 = vpop.permute.xlu0 %1500
        %1502 = vrot.lane.b32.xlu0 %v1483, 126
        %v1503 = vpop.permute.xlu0 %1502
        %1504 = vrot.lane.b32.xlu0 %v1484, 126
        %v1505 = vpop.permute.xlu0 %1504
        %1506 = vrot.lane.b32.xlu0 %v1485, 126
        %v1507 = vpop.permute.xlu0 %1506
        %v1508 = vsel %vm1499, %v1501, 0.0
        %v1509 = vsel %vm1499, %v1503, 0.0
        %v1510 = vsel %vm1499, %v1505, 0.0
        %v1511 = vsel %vm1499, %v1507, 0.0
        %1512 = vset.pattern.permute.xlu0 6
        %1513 = vperm.xlu0 %1512, %v1250
        %v1514 = vpop.permute.xlu0 %1513
        %1516 = vset.pattern.permute.xlu0 6
        %1517 = vperm.xlu0 %1516, %v1251
        %v1518 = vpop.permute.xlu0 %1517
        %1520 = vset.pattern.permute.xlu0 6
        %1521 = vperm.xlu0 %1520, %v1252
        %v1522 = vpop.permute.xlu0 %1521
        %1524 = vset.pattern.permute.xlu0 6
        %1525 = vperm.xlu0 %1524, %v1253
        %v1526 = vpop.permute.xlu0 %1525
        %v1528 = vmul.f32 %v1514, %v1495
        %v1529 = vmul.f32 %v1518, %v1496
        %v1530 = vmul.f32 %v1522, %v1497
        %v1531 = vmul.f32 %v1526, %v1498
        %1532 = vset.pattern.permute.xlu0 7
        %1533 = vperm.xlu0 %1532, %v1250
        %v1534 = vpop.permute.xlu0 %1533
        %1536 = vset.pattern.permute.xlu0 7
        %1537 = vperm.xlu0 %1536, %v1251
        %v1538 = vpop.permute.xlu0 %1537
        %1540 = vset.pattern.permute.xlu0 7
        %1541 = vperm.xlu0 %1540, %v1252
        %v1542 = vpop.permute.xlu0 %1541
        %1544 = vset.pattern.permute.xlu0 7
        %1545 = vperm.xlu0 %1544, %v1253
        %v1546 = vpop.permute.xlu0 %1545
        %v1548 = vmul.f32 %v1534, %v1482
        %v1549 = vmul.f32 %v1538, %v1483
        %v1550 = vmul.f32 %v1542, %v1484
        %v1551 = vmul.f32 %v1546, %v1485
        %v1552 = vadd.f32 %v1528, %v1548
        %v1553 = vadd.f32 %v1529, %v1549
        %v1554 = vadd.f32 %v1530, %v1550
        %v1555 = vadd.f32 %v1531, %v1551
        %1556 = vset.pattern.permute.xlu0 8
        %1557 = vperm.xlu0 %1556, %v1250
        %v1558 = vpop.permute.xlu0 %1557
        %1560 = vset.pattern.permute.xlu0 8
        %1561 = vperm.xlu0 %1560, %v1251
        %v1562 = vpop.permute.xlu0 %1561
        %1564 = vset.pattern.permute.xlu0 8
        %1565 = vperm.xlu0 %1564, %v1252
        %v1566 = vpop.permute.xlu0 %1565
        %1568 = vset.pattern.permute.xlu0 8
        %1569 = vperm.xlu0 %1568, %v1253
        %v1570 = vpop.permute.xlu0 %1569
        %v1572 = vmul.f32 %v1558, %v1508
        %v1573 = vmul.f32 %v1562, %v1509
        %v1574 = vmul.f32 %v1566, %v1510
        %v1575 = vmul.f32 %v1570, %v1511
        %v1576 = vadd.f32 %v1552, %v1572
        %v1577 = vadd.f32 %v1553, %v1573
        %v1578 = vadd.f32 %v1554, %v1574
        %v1579 = vadd.f32 %v1555, %v1575
        %1580 = vset.pattern.permute.xlu0 3
        %1581 = vperm.xlu0 %1580, %v1250
        %v1582 = vpop.permute.xlu0 %1581
        %1584 = vset.pattern.permute.xlu0 3
        %1585 = vperm.xlu0 %1584, %v1251
        %v1586 = vpop.permute.xlu0 %1585
        %1588 = vset.pattern.permute.xlu0 3
        %1589 = vperm.xlu0 %1588, %v1252
        %v1590 = vpop.permute.xlu0 %1589
        %1592 = vset.pattern.permute.xlu0 3
        %1593 = vperm.xlu0 %1592, %v1253
        %v1594 = vpop.permute.xlu0 %1593
        %v1596 = vadd.f32 %v1576, %v1582
        %v1597 = vadd.f32 %v1577, %v1586
        %v1598 = vadd.f32 %v1578, %v1590
        %v1599 = vadd.f32 %v1579, %v1594
        %vm1600 = vcmp.gt.f32.partialorder %v1596, 0.0
        %vm1601 = vcmp.gt.f32.partialorder %v1597, 0.0
        %vm1602 = vcmp.gt.f32.partialorder %v1598, 0.0
        %vm1603 = vcmp.gt.f32.partialorder %v1599, 0.0
        %v1604 = vstv %s1259
        %v1605 = vmul.f32 %v1604, %v1596
        %v1606 = vmul.f32 %v1604, %v1597
        %v1607 = vmul.f32 %v1604, %v1598
        %v1608 = vmul.f32 %v1604, %v1599
        %v1609 = vsel %vm1600, %v1596, %v1605
        %v1610 = vsel %vm1601, %v1597, %v1606
        %v1611 = vsel %vm1602, %v1598, %v1607
        %v1612 = vsel %vm1603, %v1599, %v1608
        %v1613 = vadd.f32 %v1609, %v1610
        %v1614 = vadd.f32 %v1613, %v1611
        %v1615 = vadd.f32 %v1614, %v1612
        %1616 = vadd.xlane.f32.xlu0 %v1615
        %v1617 = vpop.xlane.xlu0 %1616
        %v1618 = vrot.slane %v1617, 4
        %v1619 = vadd.f32 %v1617, %v1618
        %v1620 = vrot.slane %v1619, 2
        %v1621 = vadd.f32 %v1619, %v1620
        %v1622 = vrot.slane %v1621, 1
        %v1623 = vadd.f32 %v1621, %v1622
        %s1624 = vtos %v1623
        %v1625 = vmul.f32 %v1609, %v1609
        %v1626 = vmul.f32 %v1610, %v1610
        %v1627 = vmul.f32 %v1611, %v1611
        %v1628 = vmul.f32 %v1612, %v1612
        %v1629 = vadd.f32 %v1625, %v1626
        %v1630 = vadd.f32 %v1629, %v1627
        %v1631 = vadd.f32 %v1630, %v1628
        %1632 = vadd.xlane.f32.xlu0 %v1631
        %v1633 = vpop.xlane.xlu0 %1632
        %v1634 = vrot.slane %v1633, 4
        %v1635 = vadd.f32 %v1633, %v1634
        %v1636 = vrot.slane %v1635, 2
        %v1637 = vadd.f32 %v1635, %v1636
        %v1638 = vrot.slane %v1637, 1
        %v1639 = vadd.f32 %v1637, %v1638
        %s1640 = vtos %v1639
        %v1641 = vrcp.pop 4096.0
        %s1642 = vtos %v1641
        %s1643 = smul.f32 %s1624, %s1642
        %v1644 = vrcp.pop 4096.0
        %s1645 = vtos %v1644
        %s1646 = smul.f32 %s1640, %s1645
        %s1647 = smul.f32 %s1643, %s1643
        %s1648 = ssub.f32 %s1646, %s1647
        %s1649 = smax.f32 %s1648, 0.0
        %v1650 = vstv %s1643
        %v1651 = vsub.f32 %v1609, %v1650
        %v1652 = vsub.f32 %v1610, %v1650
        %v1653 = vsub.f32 %v1611, %v1650
        %v1654 = vsub.f32 %v1612, %v1650
        %s1655 = sadd.f32 %s1649, 1e-08
        %v1656 = vstv %s1655
        %v1657 = vrsqrt.pop %v1656
        %s1658 = vtos %v1657
        %v1659 = vstv %s1658
        %v1660 = vmul.f32 %v1651, %v1659
        %v1661 = vmul.f32 %v1652, %v1659
        %v1662 = vmul.f32 %v1653, %v1659
        %v1663 = vmul.f32 %v1654, %v1659
        %1664 = vset.pattern.permute.xlu0 4
        %1665 = vperm.xlu0 %1664, %v1250
        %v1666 = vpop.permute.xlu0 %1665
        %1668 = vset.pattern.permute.xlu0 4
        %1669 = vperm.xlu0 %1668, %v1251
        %v1670 = vpop.permute.xlu0 %1669
        %1672 = vset.pattern.permute.xlu0 4
        %1673 = vperm.xlu0 %1672, %v1252
        %v1674 = vpop.permute.xlu0 %1673
        %1676 = vset.pattern.permute.xlu0 4
        %1677 = vperm.xlu0 %1676, %v1253
        %v1678 = vpop.permute.xlu0 %1677
        %v1680 = vmul.f32 %v1660, %v1666
        %v1681 = vmul.f32 %v1661, %v1670
        %v1682 = vmul.f32 %v1662, %v1674
        %v1683 = vmul.f32 %v1663, %v1678
        %1684 = vset.pattern.permute.xlu0 5
        %1685 = vperm.xlu0 %1684, %v1250
        %v1686 = vpop.permute.xlu0 %1685
        %1688 = vset.pattern.permute.xlu0 5
        %1689 = vperm.xlu0 %1688, %v1251
        %v1690 = vpop.permute.xlu0 %1689
        %1692 = vset.pattern.permute.xlu0 5
        %1693 = vperm.xlu0 %1692, %v1252
        %v1694 = vpop.permute.xlu0 %1693
        %1696 = vset.pattern.permute.xlu0 5
        %1697 = vperm.xlu0 %1696, %v1253
        %v1698 = vpop.permute.xlu0 %1697
        %v1700 = vadd.f32 %v1680, %v1686
        %v1701 = vadd.f32 %v1681, %v1690
        %v1702 = vadd.f32 %v1682, %v1694
        %v1703 = vadd.f32 %v1683, %v1698
        %s1704 = scalar_lea.vmem %s499, 32
        %v1705 = vld [vmem:[%s1704] sm:$0xff]
        %v1706 = vld [vmem:[%s1704 + $0x8] sm:$0xff]
        %v1707 = vld [vmem:[%s1704 + $0x10] sm:$0xff]
        %v1708 = vld [vmem:[%s1704 + $0x18] sm:$0xff]
        %v1710 = vsel %vm1123, %v1705, 0
        %v1713 = vsel %vm1123, %v1706, 0
        %v1716 = vsel %vm1123, %v1707, 0
        %v1719 = vsel %vm1123, %v1708, 0
        %1721 = vmatprep.subr.mxu0 0.0
        %1722 = vmatpush1.msra.mxu0 %v1700
        %1723 = vmatprep.subr.mxu0 0.0
        %1724 = vmatpush1.msra.mxu0 %v1701
        %1725 = vmatprep.subr.mxu0 0.0
        %1726 = vmatpush1.msra.mxu0 %v1702
        %1727 = vmatprep.subr.mxu0 0.0
        %1728 = vmatpush1.msra.mxu0 %v1703
        %1729 = vmatprep.subr.mxu0 0.0
        %1730 = vmatpush1.msra.mxu0 0.0
        %1731 = vmatprep.subr.mxu0 0.0
        %1732 = vmatpush1.msra.mxu0 0.0
        %1733 = vmatprep.subr.mxu0 0.0
        %1734 = vmatpush1.msra.mxu0 0.0
        %1735 = vmatprep.subr.mxu0 0.0
        %1736 = vmatpush1.msra.mxu0 0.0
        %1737 = vmatprep.subr.mxu0 0.0
        %1738 = vmatpush1.msra.mxu0 0.0
        %1739 = vmatprep.subr.mxu0 0.0
        %1740 = vmatpush1.msra.mxu0 0.0
        %1741 = vmatprep.subr.mxu0 0.0
        %1742 = vmatpush1.msra.mxu0 0.0
        %1743 = vmatprep.subr.mxu0 0.0
        %1744 = vmatpush1.msra.mxu0 0.0
        %1745 = vmatprep.subr.mxu0 0.0
        %1746 = vmatpush1.msra.mxu0 0.0
        %1747 = vmatprep.subr.mxu0 0.0
        %1748 = vmatpush1.msra.mxu0 0.0
        %1749 = vmatprep.subr.mxu0 0.0
        %1750 = vmatpush1.msra.mxu0 0.0
        %1751 = vmatprep.subr.mxu0 0.0
        %1752 = vmatpush1.msra.mxu0 0.0
        %1753 = vmatprep.subr.mxu0 0.0
        %1754 = vmatpush1.msra.mxu0 0.0
        %1755 = vmatprep.subr.mxu0 0.0
        %1756 = vmatpush1.msra.mxu0 0.0
        %1757 = vmatprep.subr.mxu0 0.0
        %1758 = vmatpush1.msra.mxu0 0.0
        %1759 = vmatprep.subr.mxu0 0.0
        %1760 = vmatpush1.msra.mxu0 0.0
        %1761 = vmatprep.subr.mxu0 0.0
        %1762 = vmatpush1.msra.mxu0 0.0
        %1763 = vmatprep.subr.mxu0 0.0
        %1764 = vmatpush1.msra.mxu0 0.0
        %1765 = vmatprep.subr.mxu0 0.0
        %1766 = vmatpush1.msra.mxu0 0.0
        %1767 = vmatprep.subr.mxu0 0.0
        %1768 = vmatpush1.msra.mxu0 0.0
        %1769 = vmatprep.subr.mxu0 0.0
        %1770 = vmatpush1.msra.mxu0 0.0
        %1771 = vmatprep.subr.mxu0 0.0
        %1772 = vmatpush1.msra.mxu0 0.0
        %1773 = vmatprep.subr.mxu0 0.0
        %1774 = vmatpush1.msra.mxu0 0.0
        %1775 = vmatprep.subr.mxu0 0.0
        %1776 = vmatpush1.msra.mxu0 0.0
        %1777 = vmatprep.subr.mxu0 0.0
        %1778 = vmatpush1.msra.mxu0 0.0
        %1779 = vmatprep.subr.mxu0 0.0
        %1780 = vmatpush1.msra.mxu0 0.0
        %1781 = vmatprep.subr.mxu0 0.0
        %1782 = vmatpush1.msra.mxu0 0.0
        %1783 = vmatprep.subr.mxu0 0.0
        %1784 = vmatpush1.msra.mxu0 0.0
        %1785 = vmatprep.mubr.f32.mxu0 0.0
        %1786 = vmatmul.mubr.f32.gmra.mrb[0].mxu0 %v1710
        %v1787 = vpop.f32.mrb[0].mxu0
        %v1788 = vadd.f32 0.0, %v1787
        %v1789 = vpop.f32.mrb[0].mxu0
        %1790 = vmatprep.mubr.f32.mxu0 0.0
        %1791 = vmatmul.mubr.f32.gmra.mrb[0].mxu0 %v1713
        %v1792 = vpop.f32.mrb[0].mxu0
        %v1793 = vadd.f32 0.0, %v1792
        %v1794 = vpop.f32.mrb[0].mxu0
        %1795 = vmatprep.mubr.f32.mxu0 0.0
        %1796 = vmatmul.mubr.f32.gmra.mrb[0].mxu0 %v1716
        %v1797 = vpop.f32.mrb[0].mxu0
        %v1798 = vadd.f32 0.0, %v1797
        %v1799 = vpop.f32.mrb[0].mxu0
        %1800 = vmatprep.mubr.f32.mxu0 0.0
        %1801 = vmatmul.mubr.f32.gmra.mrb[0].mxu0 %v1719
        %v1802 = vpop.f32.mrb[0].mxu0
        %v1803 = vadd.f32 0.0, %v1802
        %v1804 = vpop.f32.mrb[0].mxu0
        %1805 = vdwg.mxu0
        %s1806 = scalar_lea.vmem %s506, 16
        %v1807 = vld [vmem:[%s1806] sm:$0xff]
        %v1808 = vld [vmem:[%s1806 + $0x8] sm:$0xff]
        %v1809 = vadd.f32 %v1235, %v1788
        %v1810 = vadd.f32 %v1236, %v1793
        %1812 = vset.pattern.permute.xlu0 0
        %1813 = vperm.xlu0 %1812, %v1807
        %v1814 = vpop.permute.xlu0 %1813
        %1817 = vset.pattern.permute.xlu0 0
        %1818 = vperm.xlu0 %1817, %v1808
        %v1819 = vpop.permute.xlu0 %1818
        %v1821 = vadd.f32 %v1809, %v1814
        %v1822 = vadd.f32 %v1810, %v1819
        %v1823 = vadd.f32 %v1247, %v1798
        %v1824 = vadd.f32 %v1248, %v1803
        %1825 = vset.pattern.permute.xlu0 1
        %1826 = vperm.xlu0 %1825, %v1807
        %v1827 = vpop.permute.xlu0 %1826
        %1829 = vset.pattern.permute.xlu0 1
        %1830 = vperm.xlu0 %1829, %v1808
        %v1831 = vpop.permute.xlu0 %1830
        %v1833 = vadd.f32 %v1823, %v1827
        %v1834 = vadd.f32 %v1824, %v1831
        %1835 = vst [vmem:[#allocation2] sm:$0xff] %v1821
        %1836 = vst [vmem:[#allocation2 + $0x8] sm:$0xff] %v1822
        %1837 = vst [vmem:[#allocation3] sm:$0xff] %v1833
        %1838 = vst [vmem:[#allocation3 + $0x8] sm:$0xff] %v1834
        %p1839 = scmp.eq.s32.totalorder %s31, 1
        // Predicated region
        $region73: #{tpu_custom_call.1} parent=63 // pred_check
          %p1840 = pneg %p1839
        $region74: #{tpu_custom_call.1} parent=63 // pred_check_branch
          %1842 = sbr.rel (%p1840) target = $region76
        $region75: #{tpu_custom_call.1} parent=63 // pred_region
          %s1843 = sld [smem:[#allocation4 + $0x8]]
          %vm1844 = vcmp.gt.f32.partialorder %v1833, 0.0
          %vm1845 = vcmp.gt.f32.partialorder %v1834, 0.0
          %v1846 = vstv %s1843
          %v1847 = vmul.f32 %v1846, %v1833
          %v1848 = vmul.f32 %v1846, %v1834
          %v1849 = vsel %vm1844, %v1833, %v1847
          %v1850 = vsel %vm1845, %v1834, %v1848
          %v1851 = vld [vmem:[%s8] sm:$0xff]
          %v1852 = vld [vmem:[%s9] sm:$0xff]
          %1854 = vset.pattern.permute.xlu0 0
          %1855 = vperm.xlu0 %1854, %v1852
          %v1856 = vpop.permute.xlu0 %1855
          %v1859 = vsel %vm699, %v1851, 0
          %1861 = vmatprep.subr.mxu0 0.0
          %1862 = vmatpush1.msra.mxu0 %v1849
          %1863 = vmatprep.subr.mxu0 0.0
          %1864 = vmatpush1.msra.mxu0 %v1850
          %1865 = vmatprep.subr.mxu0 0.0
          %1866 = vmatpush1.msra.mxu0 0.0
          %1867 = vmatprep.subr.mxu0 0.0
          %1868 = vmatpush1.msra.mxu0 0.0
          %1869 = vmatprep.subr.mxu0 0.0
          %1870 = vmatpush1.msra.mxu0 0.0
          %1871 = vmatprep.subr.mxu0 0.0
          %1872 = vmatpush1.msra.mxu0 0.0
          %1873 = vmatprep.subr.mxu0 0.0
          %1874 = vmatpush1.msra.mxu0 0.0
          %1875 = vmatprep.subr.mxu0 0.0
          %1876 = vmatpush1.msra.mxu0 0.0
          %1877 = vmatprep.subr.mxu0 0.0
          %1878 = vmatpush1.msra.mxu0 0.0
          %1879 = vmatprep.subr.mxu0 0.0
          %1880 = vmatpush1.msra.mxu0 0.0
          %1881 = vmatprep.subr.mxu0 0.0
          %1882 = vmatpush1.msra.mxu0 0.0
          %1883 = vmatprep.subr.mxu0 0.0
          %1884 = vmatpush1.msra.mxu0 0.0
          %1885 = vmatprep.subr.mxu0 0.0
          %1886 = vmatpush1.msra.mxu0 0.0
          %1887 = vmatprep.subr.mxu0 0.0
          %1888 = vmatpush1.msra.mxu0 0.0
          %1889 = vmatprep.subr.mxu0 0.0
          %1890 = vmatpush1.msra.mxu0 0.0
          %1891 = vmatprep.subr.mxu0 0.0
          %1892 = vmatpush1.msra.mxu0 0.0
          %1893 = vmatprep.subr.mxu0 0.0
          %1894 = vmatpush1.msra.mxu0 0.0
          %1895 = vmatprep.subr.mxu0 0.0
          %1896 = vmatpush1.msra.mxu0 0.0
          %1897 = vmatprep.subr.mxu0 0.0
          %1898 = vmatpush1.msra.mxu0 0.0
          %1899 = vmatprep.subr.mxu0 0.0
          %1900 = vmatpush1.msra.mxu0 0.0
          %1901 = vmatprep.subr.mxu0 0.0
          %1902 = vmatpush1.msra.mxu0 0.0
          %1903 = vmatprep.subr.mxu0 0.0
          %1904 = vmatpush1.msra.mxu0 0.0
          %1905 = vmatprep.subr.mxu0 0.0
          %1906 = vmatpush1.msra.mxu0 0.0
          %1907 = vmatprep.subr.mxu0 0.0
          %1908 = vmatpush1.msra.mxu0 0.0
          %1909 = vmatprep.subr.mxu0 0.0
          %1910 = vmatpush1.msra.mxu0 0.0
          %1911 = vmatprep.subr.mxu0 0.0
          %1912 = vmatpush1.msra.mxu0 0.0
          %1913 = vmatprep.subr.mxu0 0.0
          %1914 = vmatpush1.msra.mxu0 0.0
          %1915 = vmatprep.subr.mxu0 0.0
          %1916 = vmatpush1.msra.mxu0 0.0
          %1917 = vmatprep.subr.mxu0 0.0
          %1918 = vmatpush1.msra.mxu0 0.0
          %1919 = vmatprep.subr.mxu0 0.0
          %1920 = vmatpush1.msra.mxu0 0.0
          %1921 = vmatprep.subr.mxu0 0.0
          %1922 = vmatpush1.msra.mxu0 0.0
          %1923 = vmatprep.subr.mxu0 0.0
          %1924 = vmatpush1.msra.mxu0 0.0
          %1925 = vmatprep.mubr.f32.mxu0 0.0
          %1926 = vmatmul.mubr.f32.gmra.mrb[0].mxu0 %v1859
          %v1927 = vpop.f32.mrb[0].mxu0
          %v1928 = vadd.f32 %v1856, %v1927
          %v1929 = vpop.f32.mrb[0].mxu0
          %1930 = vdwg.mxu0
          %1931 = vst [vmem:[%s475] sm:$0xff] %v1928
        $region76: #{tpu_custom_call.1} parent=63 // pred_fallthru
          _
        %s1932 = sand.u32 %s302, 1
        %s1933 = scalar_lea.sflag [#allocation5], %s1932
        %s1934 = sand.u32 %s302, 1
        %s1935 = smul.addr %s1934, 8
        %s1936 = scalar_lea.vmem [#allocation7], %s1935
        // Predicated region
        $region77: #{tpu_custom_call.1} parent=63 // pred_check
          %p1937 = pneg %p312
        $region78: #{tpu_custom_call.1} parent=63 // pred_check_branch
          %1939 = sbr.rel (%p1937) target = $region80
        $region79: #{tpu_custom_call.1} parent=63 // pred_region
          %s1941 = ssub.s32 128, 128
          %1942 = vsyncadd %s1933, %s1941
          %s1943 = smul.addr %s30, 128
          %s1944 = scalar_lea.hbm %s11, %s1943
          %s1946 = sshll.u32 %s1936, 4
          %s1947 = int_to_ptr.vmem [resolvable:$true] %s1946
          %1949 = dma.vmem_to_hbm [thread:$0]  %s1947, 128, %s1944, %s1933
        $region80: #{tpu_custom_call.1} parent=63 // pred_fallthru
          _
      $region64: #{tpu_custom_call.1} parent=5 // pred_fallthru
        _
      %p1950 = scmp.le.s32.totalorder 2, %s21
      // Predicated region
      $region81: #{tpu_custom_call.1} parent=5 // pred_check
        %p1951 = pneg %p1950
      $region82: #{tpu_custom_call.1} parent=5 // pred_check_branch
        %1953 = sbr.rel (%p1951) target = $region84
      $region83: #{tpu_custom_call.1} parent=5 // pred_region
        %s1954 = ssub.s32 %s21, 2
        // Predicated region
        $region85: #{tpu_custom_call.1} parent=83 // pred_check
          %p1955 = pneg %p318
        $region86: #{tpu_custom_call.1} parent=83 // pred_check_branch
          %1957 = sbr.rel (%p1955) target = $region88
        $region87: #{tpu_custom_call.1} parent=83 // pred_region
          %s1958 = sand.u32 %s303, 1
          %s1959 = scalar_lea.sflag [#allocation5], %s1958
          %s1960 = sand.u32 %s303, 1
          %s1961 = smul.addr %s1960, 8
          %s1962 = scalar_lea.vmem [#allocation7], %s1961
          %1963 = dma.done %s1959, 128
        $region88: #{tpu_custom_call.1} parent=83 // pred_fallthru
          _
      $region84: #{tpu_custom_call.1} parent=5 // pred_fallthru
        _
    $region6: #{tpu_custom_call.1} parent=1 // loop_footer
      %s25 = sadd.s32 1, %s21
    $region7: #{tpu_custom_call.1} parent=1 // loop_footer_branch
      %20 = sbr.rel target = $region3
    $region8: #{tpu_custom_call.1} parent=1 // loop_exit
      _
    %1964 = vsyncpa [#allocation5], 1
    %s1965 = scalar_lea.sflag [#allocation5], 1
    %1966 = vsyncpa %s1965, 1
    %1967 = vsyncpa [#allocation6], 1
    %s1968 = scalar_lea.sflag [#allocation6], 1
    %1969 = vsyncpa %s1968, 1

</llo_original>
